<compile_context>
chip_gen: v5e
topology: v5e:2x2
jax: 0.10.0
libtpu: 0.0.40
codegen_flags: <defaults>
</compile_context>

<pallas_src>
import numpy as np

import jax
import jax.numpy as jnp
from jax.experimental import pallas as pl
from jax.experimental.pallas import tpu as pltpu

# ----------------------------------------------------------------------------
# constants from the PyTorch norm()/de_norm() helpers
# ----------------------------------------------------------------------------
MEAN = np.array([0.50194553, 0.01158151], dtype=np.float32)
STD = np.array([0.35423523, 0.03827245], dtype=np.float32)

# problem dimensions implied by the forward pass
N_PARAM = 11          # PARSEC feature count
N_KPT = 26            # keypoints      (26 * 2 = 52)
N_PTS = 257           # decoded points (257 * 2 = 514)
LATENT = 32           # synthetic VAE latent dim
TEMB = 16             # synthetic time-embedding dim
DDIM_STEPS = 8        # synthetic DDIM schedule length

# norm():    y = (x - mean)/std * 2 - 1  ==  x * (2/std) + (-(2*mean/std) - 1)
# de_norm(): y = (x + 1)/2 * std + mean  ==  x * (std/2) + (std/2 + mean)
# Precompute the fused multiply-add constants, tiled to the lane-dense layouts
# (B, 52) and (B, 514) so the affines live in the matmul epilogues.
NORM_SCALE = np.tile(2.0 / STD, N_KPT).reshape(1, N_KPT * 2).astype(np.float32)
NORM_OFFSET = np.tile(-(2.0 * MEAN / STD) - 1.0, N_KPT).reshape(1, N_KPT * 2).astype(np.float32)
DENORM_SCALE = np.tile(STD / 2.0, N_PTS).reshape(1, N_PTS * 2).astype(np.float32)
DENORM_OFFSET = np.tile(STD / 2.0 + MEAN, N_PTS).reshape(1, N_PTS * 2).astype(np.float32)

# deterministic (eta=0) DDIM schedule -> compile-time Python scalars
_betas = np.linspace(1e-4, 2e-2, DDIM_STEPS).astype(np.float64)
_abar = np.cumprod(1.0 - _betas)
SQRT_AT = [float(np.sqrt(_abar[s])) for s in range(DDIM_STEPS)]
SQRT_1MAT = [float(np.sqrt(1.0 - _abar[s])) for s in range(DDIM_STEPS)]
SQRT_APREV = [float(np.sqrt(_abar[s - 1])) if s > 0 else 1.0 for s in range(DDIM_STEPS)]
SQRT_1MAPREV = [float(np.sqrt(1.0 - _abar[s - 1])) if s > 0 else 0.0 for s in range(DDIM_STEPS)]


def _make_temb_table():
    """Sinusoidal time embedding for every DDIM step, precomputed once."""
    half = TEMB // 2
    freqs = np.exp(-np.arange(half, dtype=np.float64) * (np.log(1000.0) / half))
    rows = []
    for step in range(DDIM_STEPS):
        ang = (step / DDIM_STEPS) * freqs
        rows.append(np.concatenate([np.sin(ang), np.cos(ang)]))
    return np.stack(rows).astype(np.float32)          # (DDIM_STEPS, TEMB)


TEMB_TABLE = _make_temb_table()


# ----------------------------------------------------------------------------
# deterministic synthetic parameters for the three sub-modules
# (weight matrices are pre-split at init so no concatenation is ever needed
#  on the hot path; biases are pre-reshaped to (1, N))
# ----------------------------------------------------------------------------
def _init_params():
    k = jax.random.PRNGKey(42)
    ks = jax.random.split(k, 12)

    def w(key, shape):
        fan_in = shape[0]
        return (jax.random.normal(key, shape, jnp.float32) / jnp.sqrt(fan_in)).astype(jnp.float32)

    # modelA: (src_param 11 | tgt_param 11 | src_kpt 52) = 74 -> 64 -> 52
    a_w1 = w(ks[0], (74, 64))
    # diffusion eps-net: (x_t 32 | temb 16 | y 11 | y2 52) = 111 -> 128 -> 32
    e_w1 = w(ks[2], (111, 128))
    p = dict(
        a_w1_sp=a_w1[:N_PARAM],
        a_w1_tp=a_w1[N_PARAM:2 * N_PARAM],
        a_w1_sk=a_w1[2 * N_PARAM:],
        a_b1=jnp.zeros((1, 64), jnp.float32),
        a_w2=w(ks[1], (64, N_KPT * 2)),
        a_b2=jnp.zeros((1, N_KPT * 2), jnp.float32),
        e_w1_x=e_w1[:LATENT],
        e_w1_t=e_w1[LATENT:LATENT + TEMB],
        e_w1_y=e_w1[LATENT + TEMB:LATENT + TEMB + N_PARAM],
        e_w1_y2=e_w1[LATENT + TEMB + N_PARAM:],
        e_b1=jnp.zeros((1, 128), jnp.float32),
        e_w2=w(ks[3], (128, LATENT)),
        e_b2=jnp.zeros((1, LATENT), jnp.float32),
        # vae decoder: 32 -> 128 -> 514
        v_w1=w(ks[4], (LATENT, 128)),
        v_b1=jnp.zeros((1, 128), jnp.float32),
        v_w2=w(ks[5], (128, N_PTS * 2)),
        v_b2=jnp.zeros((1, N_PTS * 2), jnp.float32),
    )
    return p


PARAMS = _init_params()


# ----------------------------------------------------------------------------
# single fused Pallas kernel: modelA + norm + DDIM loop + VAE decode + de_norm
# ----------------------------------------------------------------------------
def _fused_forward_kernel(
    src_p_ref, tgt_p_ref, src_k_ref, x0_ref, temb_ref,
    a_w1_sp_ref, a_w1_tp_ref, a_w1_sk_ref, a_b1_ref, a_w2_ref, a_b2_ref,
    nscale_ref, noff_ref,
    e_w1_x_ref, e_w1_t_ref, e_w1_y_ref, e_w1_y2_ref, e_b1_ref, e_w2_ref, e_b2_ref,
    v_w1_ref, v_b1_ref, v_w2_ref, v_b2_ref,
    dscale_ref, doff_ref,
    o_ref,
):
    f32 = jnp.float32
    sp = src_p_ref[...]                                   # (B, 11)
    tp = tgt_p_ref[...]                                   # (B, 11)
    sk = src_k_ref[...]                                   # (B, 52)

    # ---- modelA: 74 -> 64 -> 52 (input concat folded into pre-split weights)
    h = jnp.dot(sp, a_w1_sp_ref[...], preferred_element_type=f32)
    h = h + jnp.dot(tp, a_w1_tp_ref[...], preferred_element_type=f32)
    h = h + jnp.dot(sk, a_w1_sk_ref[...], preferred_element_type=f32)
    h = jnp.maximum(h + a_b1_ref[...], 0.0)
    kpt = jnp.dot(h, a_w2_ref[...], preferred_element_type=f32) + a_b2_ref[...]
    # norm() fused as a single multiply-add on the lane-dense (B, 52) layout
    kpt_n = kpt * nscale_ref[...] + noff_ref[...]

    # ---- hoisted (loop-invariant) contributions of the eps-net first layer
    cond = (jnp.dot(tp, e_w1_y_ref[...], preferred_element_type=f32)
            + jnp.dot(kpt_n, e_w1_y2_ref[...], preferred_element_type=f32)
            + e_b1_ref[...])                              # (B, 128)
    temb_c = jnp.dot(temb_ref[...], e_w1_t_ref[...],
                     preferred_element_type=f32)          # (DDIM_STEPS, 128)

    # ---- DDIM sampling (eta = 0), fully unrolled; x_t never leaves vregs
    e_w1_x = e_w1_x_ref[...]
    e_w2 = e_w2_ref[...]
    e_b2 = e_b2_ref[...]
    x_t = x0_ref[...]                                     # (B, 32)
    for step in range(DDIM_STEPS - 1, -1, -1):
        h1 = jnp.dot(x_t, e_w1_x, preferred_element_type=f32)
        h1 = jnp.maximum(h1 + cond + temb_c[step:step + 1, :], 0.0)
        eps = jnp.dot(h1, e_w2, preferred_element_type=f32) + e_b2
        x0 = (x_t - SQRT_1MAT[step] * eps) * (1.0 / SQRT_AT[step])
        x_t = SQRT_APREV[step] * x0 + SQRT_1MAPREV[step] * eps

    # ---- VAE decode 32 -> 128 -> 514 with de_norm() fused epilogue
    hv = jnp.maximum(
        jnp.dot(x_t, v_w1_ref[...], preferred_element_type=f32) + v_b1_ref[...], 0.0)
    out = jnp.dot(hv, v_w2_ref[...], preferred_element_type=f32) + v_b2_ref[...]
    o_ref[...] = out * dscale_ref[...] + doff_ref[...]    # (B, 514), lane-dense


# ----------------------------------------------------------------------------
# Diff_AB_Parsec.forward (jitted wrapper; only reshapes live outside Pallas)
# ----------------------------------------------------------------------------
@jax.jit
def diff_ab_parsec_forward(source_param, target_param, source_keypoint):
    B = source_param.shape[0]
    sp = source_param.reshape(B, N_PARAM).astype(jnp.float32)
    tp = target_param.reshape(B, N_PARAM).astype(jnp.float32)      # = squeeze(-1)
    sk = source_keypoint.reshape(B, N_KPT * 2).astype(jnp.float32)
    # initial DDIM noise (batch_size arg of sample_ddim is driven by the condition batch)
    x0 = jax.random.normal(jax.random.PRNGKey(7), (B, LATENT), jnp.float32)

    inputs = (
        sp, tp, sk, x0, jnp.asarray(TEMB_TABLE),
        PARAMS["a_w1_sp"], PARAMS["a_w1_tp"], PARAMS["a_w1_sk"],
        PARAMS["a_b1"], PARAMS["a_w2"], PARAMS["a_b2"],
        jnp.asarray(NORM_SCALE), jnp.asarray(NORM_OFFSET),
        PARAMS["e_w1_x"], PARAMS["e_w1_t"], PARAMS["e_w1_y"], PARAMS["e_w1_y2"],
        PARAMS["e_b1"], PARAMS["e_w2"], PARAMS["e_b2"],
        PARAMS["v_w1"], PARAMS["v_b1"], PARAMS["v_w2"], PARAMS["v_b2"],
        jnp.asarray(DENORM_SCALE), jnp.asarray(DENORM_OFFSET),
    )
    # tiny shapes: every array is one whole-array VMEM block (legal: block == full dims)
    in_specs = [pl.BlockSpec(x.shape, lambda i: (0, 0)) for x in inputs]

    out = pl.pallas_call(
        _fused_forward_kernel,
        out_shape=jax.ShapeDtypeStruct((B, N_PTS * 2), jnp.float32),
        grid=(1,),
        in_specs=in_specs,
        out_specs=pl.BlockSpec((B, N_PTS * 2), lambda i: (0, 0)),
        # launch/latency-bound at B=2: no megacore splitting (deliberate, see review)
        compiler_params=pltpu.CompilerParams(dimension_semantics=("arbitrary",)),
    )(*inputs)

    return out.reshape(B, N_PTS, 2)                       # target_point_pred


# TODO(synk): modelA / vae / diffusion are external injected modules in the
# original code; they are synthesized here as deterministic MLP stand-ins.

if __name__ == "__main__":
    B = 2
    key = jax.random.PRNGKey(0)
    k1, k2, k3 = jax.random.split(key, 3)
    source_param = jax.random.normal(k1, (B, N_PARAM, 1), jnp.float32)
    target_param = jax.random.normal(k2, (B, N_PARAM, 1), jnp.float32)
    source_keypoint = jax.random.uniform(k3, (B, N_KPT, 2), jnp.float32)

    out = diff_ab_parsec_forward(source_param, target_param, source_keypoint)
    out = jax.block_until_ready(out)
    assert out.shape == (B, N_PTS, 2), out.shape
    assert out.dtype == jnp.float32
    print("KERNEL_OK")
</pallas_src>

<mosaic_0001>
module attributes {stable_mosaic.version = 11 : i64} {
  func.func @_fused_forward_kernel(%arg0: i32, %arg1: memref<2x11xf32, #tpu.memory_space<vmem>>, %arg2: memref<2x11xf32, #tpu.memory_space<vmem>>, %arg3: memref<2x52xf32, #tpu.memory_space<vmem>>, %arg4: memref<2x32xf32, #tpu.memory_space<vmem>>, %arg5: memref<8x16xf32, #tpu.memory_space<vmem>>, %arg6: memref<11x64xf32, #tpu.memory_space<vmem>>, %arg7: memref<11x64xf32, #tpu.memory_space<vmem>>, %arg8: memref<52x64xf32, #tpu.memory_space<vmem>>, %arg9: memref<1x64xf32, #tpu.memory_space<vmem>>, %arg10: memref<64x52xf32, #tpu.memory_space<vmem>>, %arg11: memref<1x52xf32, #tpu.memory_space<vmem>>, %arg12: memref<1x52xf32, #tpu.memory_space<vmem>>, %arg13: memref<1x52xf32, #tpu.memory_space<vmem>>, %arg14: memref<32x128xf32, #tpu.memory_space<vmem>>, %arg15: memref<16x128xf32, #tpu.memory_space<vmem>>, %arg16: memref<11x128xf32, #tpu.memory_space<vmem>>, %arg17: memref<52x128xf32, #tpu.memory_space<vmem>>, %arg18: memref<1x128xf32, #tpu.memory_space<vmem>>, %arg19: memref<128x32xf32, #tpu.memory_space<vmem>>, %arg20: memref<1x32xf32, #tpu.memory_space<vmem>>, %arg21: memref<32x128xf32, #tpu.memory_space<vmem>>, %arg22: memref<1x128xf32, #tpu.memory_space<vmem>>, %arg23: memref<128x514xf32, #tpu.memory_space<vmem>>, %arg24: memref<1x514xf32, #tpu.memory_space<vmem>>, %arg25: memref<1x514xf32, #tpu.memory_space<vmem>>, %arg26: memref<1x514xf32, #tpu.memory_space<vmem>>, %arg27: memref<2x514xf32, #tpu.memory_space<vmem>>) attributes {dimension_semantics = [#tpu.dimension_semantics<arbitrary>], iteration_bounds = array<i64: 1>, scalar_prefetch = 0 : i64, scratch_operands = 0 : i64, tpu.core_type = #tpu.core_type<tc>, window_params = [{pipeline_mode = #tpu.pipeline_mode<synchronous>, transform_indices = @transform_0, window_bounds = array<i64: 2, 11>}, {pipeline_mode = #tpu.pipeline_mode<synchronous>, transform_indices = @transform_1, window_bounds = array<i64: 2, 11>}, {pipeline_mode = #tpu.pipeline_mode<synchronous>, transform_indices = @transform_2, window_bounds = array<i64: 2, 52>}, {pipeline_mode = #tpu.pipeline_mode<synchronous>, transform_indices = @transform_3, window_bounds = array<i64: 2, 32>}, {pipeline_mode = #tpu.pipeline_mode<synchronous>, transform_indices = @transform_4, window_bounds = array<i64: 8, 16>}, {pipeline_mode = #tpu.pipeline_mode<synchronous>, transform_indices = @transform_5, window_bounds = array<i64: 11, 64>}, {pipeline_mode = #tpu.pipeline_mode<synchronous>, transform_indices = @transform_6, window_bounds = array<i64: 11, 64>}, {pipeline_mode = #tpu.pipeline_mode<synchronous>, transform_indices = @transform_7, window_bounds = array<i64: 52, 64>}, {pipeline_mode = #tpu.pipeline_mode<synchronous>, transform_indices = @transform_8, window_bounds = array<i64: 1, 64>}, {pipeline_mode = #tpu.pipeline_mode<synchronous>, transform_indices = @transform_9, window_bounds = array<i64: 64, 52>}, {pipeline_mode = #tpu.pipeline_mode<synchronous>, transform_indices = @transform_10, window_bounds = array<i64: 1, 52>}, {pipeline_mode = #tpu.pipeline_mode<synchronous>, transform_indices = @transform_11, window_bounds = array<i64: 1, 52>}, {pipeline_mode = #tpu.pipeline_mode<synchronous>, transform_indices = @transform_12, window_bounds = array<i64: 1, 52>}, {pipeline_mode = #tpu.pipeline_mode<synchronous>, transform_indices = @transform_13, window_bounds = array<i64: 32, 128>}, {pipeline_mode = #tpu.pipeline_mode<synchronous>, transform_indices = @transform_14, window_bounds = array<i64: 16, 128>}, {pipeline_mode = #tpu.pipeline_mode<synchronous>, transform_indices = @transform_15, window_bounds = array<i64: 11, 128>}, {pipeline_mode = #tpu.pipeline_mode<synchronous>, transform_indices = @transform_16, window_bounds = array<i64: 52, 128>}, {pipeline_mode = #tpu.pipeline_mode<synchronous>, transform_indices = @transform_17, window_bounds = array<i64: 1, 128>}, {pipeline_mode = #tpu.pipeline_mode<synchronous>, transform_indices = @transform_18, window_bounds = array<i64: 128, 32>}, {pipeline_mode = #tpu.pipeline_mode<synchronous>, transform_indices = @transform_19, window_bounds = array<i64: 1, 32>}, {pipeline_mode = #tpu.pipeline_mode<synchronous>, transform_indices = @transform_20, window_bounds = array<i64: 32, 128>}, {pipeline_mode = #tpu.pipeline_mode<synchronous>, transform_indices = @transform_21, window_bounds = array<i64: 1, 128>}, {pipeline_mode = #tpu.pipeline_mode<synchronous>, transform_indices = @transform_22, window_bounds = array<i64: 128, 514>}, {pipeline_mode = #tpu.pipeline_mode<synchronous>, transform_indices = @transform_23, window_bounds = array<i64: 1, 514>}, {pipeline_mode = #tpu.pipeline_mode<synchronous>, transform_indices = @transform_24, window_bounds = array<i64: 1, 514>}, {pipeline_mode = #tpu.pipeline_mode<synchronous>, transform_indices = @transform_25, window_bounds = array<i64: 1, 514>}, {pipeline_mode = #tpu.pipeline_mode<synchronous>, transform_indices = @transform_26, window_bounds = array<i64: 2, 514>}]} {
    %c0 = arith.constant 0 : index
    %c0_0 = arith.constant 0 : index
    %0 = vector.load %arg1[%c0, %c0_0] : memref<2x11xf32, #tpu.memory_space<vmem>>, vector<2x11xf32>
    %c0_1 = arith.constant 0 : index
    %c0_2 = arith.constant 0 : index
    %1 = vector.load %arg2[%c0_1, %c0_2] : memref<2x11xf32, #tpu.memory_space<vmem>>, vector<2x11xf32>
    %c0_3 = arith.constant 0 : index
    %c0_4 = arith.constant 0 : index
    %2 = vector.load %arg3[%c0_3, %c0_4] : memref<2x52xf32, #tpu.memory_space<vmem>>, vector<2x52xf32>
    %c0_5 = arith.constant 0 : index
    %c0_6 = arith.constant 0 : index
    %3 = vector.load %arg6[%c0_5, %c0_6] : memref<11x64xf32, #tpu.memory_space<vmem>>, vector<11x64xf32>
    %cst = arith.constant dense<0.000000e+00> : vector<2x64xf32>
    %4 = tpu.matmul %0, %3, %cst {dimension_numbers = #tpu.dot_dimension_numbers<[1], [0], [0], [1], [0, 0, 1, 1], [], []>} : vector<2x11xf32>, vector<11x64xf32>, vector<2x64xf32> -> vector<2x64xf32>
    %c0_7 = arith.constant 0 : index
    %c0_8 = arith.constant 0 : index
    %5 = vector.load %arg7[%c0_7, %c0_8] : memref<11x64xf32, #tpu.memory_space<vmem>>, vector<11x64xf32>
    %cst_9 = arith.constant dense<0.000000e+00> : vector<2x64xf32>
    %6 = tpu.matmul %1, %5, %cst_9 {dimension_numbers = #tpu.dot_dimension_numbers<[1], [0], [0], [1], [0, 0, 1, 1], [], []>} : vector<2x11xf32>, vector<11x64xf32>, vector<2x64xf32> -> vector<2x64xf32>
    %7 = arith.addf %4, %6 : vector<2x64xf32>
    %c0_10 = arith.constant 0 : index
    %c0_11 = arith.constant 0 : index
    %8 = vector.load %arg8[%c0_10, %c0_11] : memref<52x64xf32, #tpu.memory_space<vmem>>, vector<52x64xf32>
    %cst_12 = arith.constant dense<0.000000e+00> : vector<2x64xf32>
    %9 = tpu.matmul %2, %8, %cst_12 {dimension_numbers = #tpu.dot_dimension_numbers<[1], [0], [0], [1], [0, 0, 1, 1], [], []>} : vector<2x52xf32>, vector<52x64xf32>, vector<2x64xf32> -> vector<2x64xf32>
    %10 = arith.addf %7, %9 : vector<2x64xf32>
    %c0_13 = arith.constant 0 : index
    %c0_14 = arith.constant 0 : index
    %11 = vector.load %arg9[%c0_13, %c0_14] : memref<1x64xf32, #tpu.memory_space<vmem>>, vector<1x64xf32>
    %12 = vector.broadcast %11 : vector<1x64xf32> to vector<2x64xf32>
    %13 = arith.addf %10, %12 : vector<2x64xf32>
    %cst_15 = arith.constant 0.000000e+00 : f32
    %14 = vector.broadcast %cst_15 : f32 to vector<2x64xf32>
    %15 = arith.maximumf %13, %14 : vector<2x64xf32>
    %c0_16 = arith.constant 0 : index
    %c0_17 = arith.constant 0 : index
    %16 = vector.load %arg10[%c0_16, %c0_17] : memref<64x52xf32, #tpu.memory_space<vmem>>, vector<64x52xf32>
    %cst_18 = arith.constant dense<0.000000e+00> : vector<2x52xf32>
    %17 = tpu.matmul %15, %16, %cst_18 {dimension_numbers = #tpu.dot_dimension_numbers<[1], [0], [0], [1], [0, 0, 1, 1], [], []>} : vector<2x64xf32>, vector<64x52xf32>, vector<2x52xf32> -> vector<2x52xf32>
    %c0_19 = arith.constant 0 : index
    %c0_20 = arith.constant 0 : index
    %18 = vector.load %arg11[%c0_19, %c0_20] : memref<1x52xf32, #tpu.memory_space<vmem>>, vector<1x52xf32>
    %19 = vector.broadcast %18 : vector<1x52xf32> to vector<2x52xf32>
    %20 = arith.addf %17, %19 : vector<2x52xf32>
    %c0_21 = arith.constant 0 : index
    %c0_22 = arith.constant 0 : index
    %21 = vector.load %arg12[%c0_21, %c0_22] : memref<1x52xf32, #tpu.memory_space<vmem>>, vector<1x52xf32>
    %22 = vector.broadcast %21 : vector<1x52xf32> to vector<2x52xf32>
    %23 = arith.mulf %20, %22 : vector<2x52xf32>
    %c0_23 = arith.constant 0 : index
    %c0_24 = arith.constant 0 : index
    %24 = vector.load %arg13[%c0_23, %c0_24] : memref<1x52xf32, #tpu.memory_space<vmem>>, vector<1x52xf32>
    %25 = vector.broadcast %24 : vector<1x52xf32> to vector<2x52xf32>
    %26 = arith.addf %23, %25 : vector<2x52xf32>
    %c0_25 = arith.constant 0 : index
    %c0_26 = arith.constant 0 : index
    %27 = vector.load %arg16[%c0_25, %c0_26] : memref<11x128xf32, #tpu.memory_space<vmem>>, vector<11x128xf32>
    %cst_27 = arith.constant dense<0.000000e+00> : vector<2x128xf32>
    %28 = tpu.matmul %1, %27, %cst_27 {dimension_numbers = #tpu.dot_dimension_numbers<[1], [0], [0], [1], [0, 0, 1, 1], [], []>} : vector<2x11xf32>, vector<11x128xf32>, vector<2x128xf32> -> vector<2x128xf32>
    %c0_28 = arith.constant 0 : index
    %c0_29 = arith.constant 0 : index
    %29 = vector.load %arg17[%c0_28, %c0_29] : memref<52x128xf32, #tpu.memory_space<vmem>>, vector<52x128xf32>
    %cst_30 = arith.constant dense<0.000000e+00> : vector<2x128xf32>
    %30 = tpu.matmul %26, %29, %cst_30 {dimension_numbers = #tpu.dot_dimension_numbers<[1], [0], [0], [1], [0, 0, 1, 1], [], []>} : vector<2x52xf32>, vector<52x128xf32>, vector<2x128xf32> -> vector<2x128xf32>
    %31 = arith.addf %28, %30 : vector<2x128xf32>
    %c0_31 = arith.constant 0 : index
    %c0_32 = arith.constant 0 : index
    %32 = vector.load %arg18[%c0_31, %c0_32] : memref<1x128xf32, #tpu.memory_space<vmem>>, vector<1x128xf32>
    %33 = vector.broadcast %32 : vector<1x128xf32> to vector<2x128xf32>
    %34 = arith.addf %31, %33 : vector<2x128xf32>
    %c0_33 = arith.constant 0 : index
    %c0_34 = arith.constant 0 : index
    %35 = vector.load %arg5[%c0_33, %c0_34] : memref<8x16xf32, #tpu.memory_space<vmem>>, vector<8x16xf32>
    %c0_35 = arith.constant 0 : index
    %c0_36 = arith.constant 0 : index
    %36 = vector.load %arg15[%c0_35, %c0_36] : memref<16x128xf32, #tpu.memory_space<vmem>>, vector<16x128xf32>
    %cst_37 = arith.constant dense<0.000000e+00> : vector<8x128xf32>
    %37 = tpu.matmul %35, %36, %cst_37 {dimension_numbers = #tpu.dot_dimension_numbers<[1], [0], [0], [1], [0, 0, 1, 1], [], []>} : vector<8x16xf32>, vector<16x128xf32>, vector<8x128xf32> -> vector<8x128xf32>
    %c0_38 = arith.constant 0 : index
    %c0_39 = arith.constant 0 : index
    %38 = vector.load %arg14[%c0_38, %c0_39] : memref<32x128xf32, #tpu.memory_space<vmem>>, vector<32x128xf32>
    %c0_40 = arith.constant 0 : index
    %c0_41 = arith.constant 0 : index
    %39 = vector.load %arg19[%c0_40, %c0_41] : memref<128x32xf32, #tpu.memory_space<vmem>>, vector<128x32xf32>
    %c0_42 = arith.constant 0 : index
    %c0_43 = arith.constant 0 : index
    %40 = vector.load %arg20[%c0_42, %c0_43] : memref<1x32xf32, #tpu.memory_space<vmem>>, vector<1x32xf32>
    %c0_44 = arith.constant 0 : index
    %c0_45 = arith.constant 0 : index
    %41 = vector.load %arg4[%c0_44, %c0_45] : memref<2x32xf32, #tpu.memory_space<vmem>>, vector<2x32xf32>
    %cst_46 = arith.constant dense<0.000000e+00> : vector<2x128xf32>
    %42 = tpu.matmul %41, %38, %cst_46 {dimension_numbers = #tpu.dot_dimension_numbers<[1], [0], [0], [1], [0, 0, 1, 1], [], []>} : vector<2x32xf32>, vector<32x128xf32>, vector<2x128xf32> -> vector<2x128xf32>
    %43 = arith.addf %42, %34 : vector<2x128xf32>
    %44 = vector.extract_strided_slice %37 {offsets = [7, 0], sizes = [1, 128], strides = [1, 1]} : vector<8x128xf32> to vector<1x128xf32>
    %45 = vector.broadcast %44 : vector<1x128xf32> to vector<2x128xf32>
    %46 = arith.addf %43, %45 : vector<2x128xf32>
    %cst_47 = arith.constant 0.000000e+00 : f32
    %47 = vector.broadcast %cst_47 : f32 to vector<2x128xf32>
    %48 = arith.maximumf %46, %47 : vector<2x128xf32>
    %cst_48 = arith.constant dense<0.000000e+00> : vector<2x32xf32>
    %49 = tpu.matmul %48, %39, %cst_48 {dimension_numbers = #tpu.dot_dimension_numbers<[1], [0], [0], [1], [0, 0, 1, 1], [], []>} : vector<2x128xf32>, vector<128x32xf32>, vector<2x32xf32> -> vector<2x32xf32>
    %50 = vector.broadcast %40 : vector<1x32xf32> to vector<2x32xf32>
    %51 = arith.addf %49, %50 : vector<2x32xf32>
    %cst_49 = arith.constant 0.278904647 : f32
    %52 = vector.broadcast %cst_49 : f32 to vector<2x32xf32>
    %53 = arith.mulf %52, %51 : vector<2x32xf32>
    %54 = arith.subf %41, %53 : vector<2x32xf32>
    %cst_50 = arith.constant 1.0413208 : f32
    %55 = vector.broadcast %cst_50 : f32 to vector<2x32xf32>
    %56 = arith.mulf %54, %55 : vector<2x32xf32>
    %cst_51 = arith.constant 0.970068454 : f32
    %57 = vector.broadcast %cst_51 : f32 to vector<2x32xf32>
    %58 = arith.mulf %57, %56 : vector<2x32xf32>
    %cst_52 = arith.constant 0.242831498 : f32
    %59 = vector.broadcast %cst_52 : f32 to vector<2x32xf32>
    %60 = arith.mulf %59, %51 : vector<2x32xf32>
    %61 = arith.addf %58, %60 : vector<2x32xf32>
    %cst_53 = arith.constant dense<0.000000e+00> : vector<2x128xf32>
    %62 = tpu.matmul %61, %38, %cst_53 {dimension_numbers = #tpu.dot_dimension_numbers<[1], [0], [0], [1], [0, 0, 1, 1], [], []>} : vector<2x32xf32>, vector<32x128xf32>, vector<2x128xf32> -> vector<2x128xf32>
    %63 = arith.addf %62, %34 : vector<2x128xf32>
    %64 = vector.extract_strided_slice %37 {offsets = [6, 0], sizes = [1, 128], strides = [1, 1]} : vector<8x128xf32> to vector<1x128xf32>
    %65 = vector.broadcast %64 : vector<1x128xf32> to vector<2x128xf32>
    %66 = arith.addf %63, %65 : vector<2x128xf32>
    %cst_54 = arith.constant 0.000000e+00 : f32
    %67 = vector.broadcast %cst_54 : f32 to vector<2x128xf32>
    %68 = arith.maximumf %66, %67 : vector<2x128xf32>
    %cst_55 = arith.constant dense<0.000000e+00> : vector<2x32xf32>
    %69 = tpu.matmul %68, %39, %cst_55 {dimension_numbers = #tpu.dot_dimension_numbers<[1], [0], [0], [1], [0, 0, 1, 1], [], []>} : vector<2x128xf32>, vector<128x32xf32>, vector<2x32xf32> -> vector<2x32xf32>
    %70 = vector.broadcast %40 : vector<1x32xf32> to vector<2x32xf32>
    %71 = arith.addf %69, %70 : vector<2x32xf32>
    %cst_56 = arith.constant 0.242831498 : f32
    %72 = vector.broadcast %cst_56 : f32 to vector<2x32xf32>
    %73 = arith.mulf %72, %71 : vector<2x32xf32>
    %74 = arith.subf %61, %73 : vector<2x32xf32>
    %cst_57 = arith.constant 1.03085506 : f32
    %75 = vector.broadcast %cst_57 : f32 to vector<2x32xf32>
    %76 = arith.mulf %74, %75 : vector<2x32xf32>
    %cst_58 = arith.constant 0.978498935 : f32
    %77 = vector.broadcast %cst_58 : f32 to vector<2x32xf32>
    %78 = arith.mulf %77, %76 : vector<2x32xf32>
    %cst_59 = arith.constant 0.206251934 : f32
    %79 = vector.broadcast %cst_59 : f32 to vector<2x32xf32>
    %80 = arith.mulf %79, %71 : vector<2x32xf32>
    %81 = arith.addf %78, %80 : vector<2x32xf32>
    %cst_60 = arith.constant dense<0.000000e+00> : vector<2x128xf32>
    %82 = tpu.matmul %81, %38, %cst_60 {dimension_numbers = #tpu.dot_dimension_numbers<[1], [0], [0], [1], [0, 0, 1, 1], [], []>} : vector<2x32xf32>, vector<32x128xf32>, vector<2x128xf32> -> vector<2x128xf32>
    %83 = arith.addf %82, %34 : vector<2x128xf32>
    %84 = vector.extract_strided_slice %37 {offsets = [5, 0], sizes = [1, 128], strides = [1, 1]} : vector<8x128xf32> to vector<1x128xf32>
    %85 = vector.broadcast %84 : vector<1x128xf32> to vector<2x128xf32>
    %86 = arith.addf %83, %85 : vector<2x128xf32>
    %cst_61 = arith.constant 0.000000e+00 : f32
    %87 = vector.broadcast %cst_61 : f32 to vector<2x128xf32>
    %88 = arith.maximumf %86, %87 : vector<2x128xf32>
    %cst_62 = arith.constant dense<0.000000e+00> : vector<2x32xf32>
    %89 = tpu.matmul %88, %39, %cst_62 {dimension_numbers = #tpu.dot_dimension_numbers<[1], [0], [0], [1], [0, 0, 1, 1], [], []>} : vector<2x128xf32>, vector<128x32xf32>, vector<2x32xf32> -> vector<2x32xf32>
    %90 = vector.broadcast %40 : vector<1x32xf32> to vector<2x32xf32>
    %91 = arith.addf %89, %90 : vector<2x32xf32>
    %cst_63 = arith.constant 0.206251934 : f32
    %92 = vector.broadcast %cst_63 : f32 to vector<2x32xf32>
    %93 = arith.mulf %92, %91 : vector<2x32xf32>
    %94 = arith.subf %81, %93 : vector<2x32xf32>
    %cst_64 = arith.constant 1.02197349 : f32
    %95 = vector.broadcast %cst_64 : f32 to vector<2x32xf32>
    %96 = arith.mulf %94, %95 : vector<2x32xf32>
    %cst_65 = arith.constant 0.985578298 : f32
    %97 = vector.broadcast %cst_65 : f32 to vector<2x32xf32>
    %98 = arith.mulf %97, %96 : vector<2x32xf32>
    %cst_66 = arith.constant 0.169220179 : f32
    %99 = vector.broadcast %cst_66 : f32 to vector<2x32xf32>
    %100 = arith.mulf %99, %91 : vector<2x32xf32>
    %101 = arith.addf %98, %100 : vector<2x32xf32>
    %cst_67 = arith.constant dense<0.000000e+00> : vector<2x128xf32>
    %102 = tpu.matmul %101, %38, %cst_67 {dimension_numbers = #tpu.dot_dimension_numbers<[1], [0], [0], [1], [0, 0, 1, 1], [], []>} : vector<2x32xf32>, vector<32x128xf32>, vector<2x128xf32> -> vector<2x128xf32>
    %103 = arith.addf %102, %34 : vector<2x128xf32>
    %104 = vector.extract_strided_slice %37 {offsets = [4, 0], sizes = [1, 128], strides = [1, 1]} : vector<8x128xf32> to vector<1x128xf32>
    %105 = vector.broadcast %104 : vector<1x128xf32> to vector<2x128xf32>
    %106 = arith.addf %103, %105 : vector<2x128xf32>
    %cst_68 = arith.constant 0.000000e+00 : f32
    %107 = vector.broadcast %cst_68 : f32 to vector<2x128xf32>
    %108 = arith.maximumf %106, %107 : vector<2x128xf32>
    %cst_69 = arith.constant dense<0.000000e+00> : vector<2x32xf32>
    %109 = tpu.matmul %108, %39, %cst_69 {dimension_numbers = #tpu.dot_dimension_numbers<[1], [0], [0], [1], [0, 0, 1, 1], [], []>} : vector<2x128xf32>, vector<128x32xf32>, vector<2x32xf32> -> vector<2x32xf32>
    %110 = vector.broadcast %40 : vector<1x32xf32> to vector<2x32xf32>
    %111 = arith.addf %109, %110 : vector<2x32xf32>
    %cst_70 = arith.constant 0.169220179 : f32
    %112 = vector.broadcast %cst_70 : f32 to vector<2x32xf32>
    %113 = arith.mulf %112, %111 : vector<2x32xf32>
    %114 = arith.subf %101, %113 : vector<2x32xf32>
    %cst_71 = arith.constant 1.0146327 : f32
    %115 = vector.broadcast %cst_71 : f32 to vector<2x32xf32>
    %116 = arith.mulf %114, %115 : vector<2x32xf32>
    %cst_72 = arith.constant 0.991280376 : f32
    %117 = vector.broadcast %cst_72 : f32 to vector<2x32xf32>
    %118 = arith.mulf %117, %116 : vector<2x32xf32>
    %cst_73 = arith.constant 0.131769583 : f32
    %119 = vector.broadcast %cst_73 : f32 to vector<2x32xf32>
    %120 = arith.mulf %119, %111 : vector<2x32xf32>
    %121 = arith.addf %118, %120 : vector<2x32xf32>
    %cst_74 = arith.constant dense<0.000000e+00> : vector<2x128xf32>
    %122 = tpu.matmul %121, %38, %cst_74 {dimension_numbers = #tpu.dot_dimension_numbers<[1], [0], [0], [1], [0, 0, 1, 1], [], []>} : vector<2x32xf32>, vector<32x128xf32>, vector<2x128xf32> -> vector<2x128xf32>
    %123 = arith.addf %122, %34 : vector<2x128xf32>
    %124 = vector.extract_strided_slice %37 {offsets = [3, 0], sizes = [1, 128], strides = [1, 1]} : vector<8x128xf32> to vector<1x128xf32>
    %125 = vector.broadcast %124 : vector<1x128xf32> to vector<2x128xf32>
    %126 = arith.addf %123, %125 : vector<2x128xf32>
    %cst_75 = arith.constant 0.000000e+00 : f32
    %127 = vector.broadcast %cst_75 : f32 to vector<2x128xf32>
    %128 = arith.maximumf %126, %127 : vector<2x128xf32>
    %cst_76 = arith.constant dense<0.000000e+00> : vector<2x32xf32>
    %129 = tpu.matmul %128, %39, %cst_76 {dimension_numbers = #tpu.dot_dimension_numbers<[1], [0], [0], [1], [0, 0, 1, 1], [], []>} : vector<2x128xf32>, vector<128x32xf32>, vector<2x32xf32> -> vector<2x32xf32>
    %130 = vector.broadcast %40 : vector<1x32xf32> to vector<2x32xf32>
    %131 = arith.addf %129, %130 : vector<2x32xf32>
    %cst_77 = arith.constant 0.131769583 : f32
    %132 = vector.broadcast %cst_77 : f32 to vector<2x32xf32>
    %133 = arith.mulf %132, %131 : vector<2x32xf32>
    %134 = arith.subf %121, %133 : vector<2x32xf32>
    %cst_78 = arith.constant 1.00879633 : f32
    %135 = vector.broadcast %cst_78 : f32 to vector<2x32xf32>
    %136 = arith.mulf %134, %135 : vector<2x32xf32>
    %cst_79 = arith.constant 0.995584905 : f32
    %137 = vector.broadcast %cst_79 : f32 to vector<2x32xf32>
    %138 = arith.mulf %137, %136 : vector<2x32xf32>
    %cst_80 = arith.constant 0.0938651859 : f32
    %139 = vector.broadcast %cst_80 : f32 to vector<2x32xf32>
    %140 = arith.mulf %139, %131 : vector<2x32xf32>
    %141 = arith.addf %138, %140 : vector<2x32xf32>
    %cst_81 = arith.constant dense<0.000000e+00> : vector<2x128xf32>
    %142 = tpu.matmul %141, %38, %cst_81 {dimension_numbers = #tpu.dot_dimension_numbers<[1], [0], [0], [1], [0, 0, 1, 1], [], []>} : vector<2x32xf32>, vector<32x128xf32>, vector<2x128xf32> -> vector<2x128xf32>
    %143 = arith.addf %142, %34 : vector<2x128xf32>
    %144 = vector.extract_strided_slice %37 {offsets = [2, 0], sizes = [1, 128], strides = [1, 1]} : vector<8x128xf32> to vector<1x128xf32>
    %145 = vector.broadcast %144 : vector<1x128xf32> to vector<2x128xf32>
    %146 = arith.addf %143, %145 : vector<2x128xf32>
    %cst_82 = arith.constant 0.000000e+00 : f32
    %147 = vector.broadcast %cst_82 : f32 to vector<2x128xf32>
    %148 = arith.maximumf %146, %147 : vector<2x128xf32>
    %cst_83 = arith.constant dense<0.000000e+00> : vector<2x32xf32>
    %149 = tpu.matmul %148, %39, %cst_83 {dimension_numbers = #tpu.dot_dimension_numbers<[1], [0], [0], [1], [0, 0, 1, 1], [], []>} : vector<2x128xf32>, vector<128x32xf32>, vector<2x32xf32> -> vector<2x32xf32>
    %150 = vector.broadcast %40 : vector<1x32xf32> to vector<2x32xf32>
    %151 = arith.addf %149, %150 : vector<2x32xf32>
    %cst_84 = arith.constant 0.0938651859 : f32
    %152 = vector.broadcast %cst_84 : f32 to vector<2x32xf32>
    %153 = arith.mulf %152, %151 : vector<2x32xf32>
    %154 = arith.subf %141, %153 : vector<2x32xf32>
    %cst_85 = arith.constant 1.0044347 : f32
    %155 = vector.broadcast %cst_85 : f32 to vector<2x32xf32>
    %156 = arith.mulf %154, %155 : vector<2x32xf32>
    %cst_86 = arith.constant 0.998477578 : f32
    %157 = vector.broadcast %cst_86 : f32 to vector<2x32xf32>
    %158 = arith.mulf %157, %156 : vector<2x32xf32>
    %cst_87 = arith.constant 0.055159431 : f32
    %159 = vector.broadcast %cst_87 : f32 to vector<2x32xf32>
    %160 = arith.mulf %159, %151 : vector<2x32xf32>
    %161 = arith.addf %158, %160 : vector<2x32xf32>
    %cst_88 = arith.constant dense<0.000000e+00> : vector<2x128xf32>
    %162 = tpu.matmul %161, %38, %cst_88 {dimension_numbers = #tpu.dot_dimension_numbers<[1], [0], [0], [1], [0, 0, 1, 1], [], []>} : vector<2x32xf32>, vector<32x128xf32>, vector<2x128xf32> -> vector<2x128xf32>
    %163 = arith.addf %162, %34 : vector<2x128xf32>
    %164 = vector.extract_strided_slice %37 {offsets = [1, 0], sizes = [1, 128], strides = [1, 1]} : vector<8x128xf32> to vector<1x128xf32>
    %165 = vector.broadcast %164 : vector<1x128xf32> to vector<2x128xf32>
    %166 = arith.addf %163, %165 : vector<2x128xf32>
    %cst_89 = arith.constant 0.000000e+00 : f32
    %167 = vector.broadcast %cst_89 : f32 to vector<2x128xf32>
    %168 = arith.maximumf %166, %167 : vector<2x128xf32>
    %cst_90 = arith.constant dense<0.000000e+00> : vector<2x32xf32>
    %169 = tpu.matmul %168, %39, %cst_90 {dimension_numbers = #tpu.dot_dimension_numbers<[1], [0], [0], [1], [0, 0, 1, 1], [], []>} : vector<2x128xf32>, vector<128x32xf32>, vector<2x32xf32> -> vector<2x32xf32>
    %170 = vector.broadcast %40 : vector<1x32xf32> to vector<2x32xf32>
    %171 = arith.addf %169, %170 : vector<2x32xf32>
    %cst_91 = arith.constant 0.055159431 : f32
    %172 = vector.broadcast %cst_91 : f32 to vector<2x32xf32>
    %173 = arith.mulf %172, %171 : vector<2x32xf32>
    %174 = arith.subf %161, %173 : vector<2x32xf32>
    %cst_92 = arith.constant 1.00152481 : f32
    %175 = vector.broadcast %cst_92 : f32 to vector<2x32xf32>
    %176 = arith.mulf %174, %175 : vector<2x32xf32>
    %cst_93 = arith.constant 0.999949991 : f32
    %177 = vector.broadcast %cst_93 : f32 to vector<2x32xf32>
    %178 = arith.mulf %177, %176 : vector<2x32xf32>
    %cst_94 = arith.constant 0.00999999977 : f32
    %179 = vector.broadcast %cst_94 : f32 to vector<2x32xf32>
    %180 = arith.mulf %179, %171 : vector<2x32xf32>
    %181 = arith.addf %178, %180 : vector<2x32xf32>
    %cst_95 = arith.constant dense<0.000000e+00> : vector<2x128xf32>
    %182 = tpu.matmul %181, %38, %cst_95 {dimension_numbers = #tpu.dot_dimension_numbers<[1], [0], [0], [1], [0, 0, 1, 1], [], []>} : vector<2x32xf32>, vector<32x128xf32>, vector<2x128xf32> -> vector<2x128xf32>
    %183 = arith.addf %182, %34 : vector<2x128xf32>
    %184 = vector.extract_strided_slice %37 {offsets = [0, 0], sizes = [1, 128], strides = [1, 1]} : vector<8x128xf32> to vector<1x128xf32>
    %185 = vector.broadcast %184 : vector<1x128xf32> to vector<2x128xf32>
    %186 = arith.addf %183, %185 : vector<2x128xf32>
    %cst_96 = arith.constant 0.000000e+00 : f32
    %187 = vector.broadcast %cst_96 : f32 to vector<2x128xf32>
    %188 = arith.maximumf %186, %187 : vector<2x128xf32>
    %cst_97 = arith.constant dense<0.000000e+00> : vector<2x32xf32>
    %189 = tpu.matmul %188, %39, %cst_97 {dimension_numbers = #tpu.dot_dimension_numbers<[1], [0], [0], [1], [0, 0, 1, 1], [], []>} : vector<2x128xf32>, vector<128x32xf32>, vector<2x32xf32> -> vector<2x32xf32>
    %190 = vector.broadcast %40 : vector<1x32xf32> to vector<2x32xf32>
    %191 = arith.addf %189, %190 : vector<2x32xf32>
    %cst_98 = arith.constant 0.00999999977 : f32
    %192 = vector.broadcast %cst_98 : f32 to vector<2x32xf32>
    %193 = arith.mulf %192, %191 : vector<2x32xf32>
    %194 = arith.subf %181, %193 : vector<2x32xf32>
    %cst_99 = arith.constant 1.000050e+00 : f32
    %195 = vector.broadcast %cst_99 : f32 to vector<2x32xf32>
    %196 = arith.mulf %194, %195 : vector<2x32xf32>
    %cst_100 = arith.constant 1.000000e+00 : f32
    %197 = vector.broadcast %cst_100 : f32 to vector<2x32xf32>
    %198 = arith.mulf %197, %196 : vector<2x32xf32>
    %cst_101 = arith.constant 0.000000e+00 : f32
    %199 = vector.broadcast %cst_101 : f32 to vector<2x32xf32>
    %200 = arith.mulf %199, %191 : vector<2x32xf32>
    %201 = arith.addf %198, %200 : vector<2x32xf32>
    %c0_102 = arith.constant 0 : index
    %c0_103 = arith.constant 0 : index
    %202 = vector.load %arg21[%c0_102, %c0_103] : memref<32x128xf32, #tpu.memory_space<vmem>>, vector<32x128xf32>
    %cst_104 = arith.constant dense<0.000000e+00> : vector<2x128xf32>
    %203 = tpu.matmul %201, %202, %cst_104 {dimension_numbers = #tpu.dot_dimension_numbers<[1], [0], [0], [1], [0, 0, 1, 1], [], []>} : vector<2x32xf32>, vector<32x128xf32>, vector<2x128xf32> -> vector<2x128xf32>
    %c0_105 = arith.constant 0 : index
    %c0_106 = arith.constant 0 : index
    %204 = vector.load %arg22[%c0_105, %c0_106] : memref<1x128xf32, #tpu.memory_space<vmem>>, vector<1x128xf32>
    %205 = vector.broadcast %204 : vector<1x128xf32> to vector<2x128xf32>
    %206 = arith.addf %203, %205 : vector<2x128xf32>
    %cst_107 = arith.constant 0.000000e+00 : f32
    %207 = vector.broadcast %cst_107 : f32 to vector<2x128xf32>
    %208 = arith.maximumf %206, %207 : vector<2x128xf32>
    %c0_108 = arith.constant 0 : index
    %c0_109 = arith.constant 0 : index
    %209 = vector.load %arg23[%c0_108, %c0_109] : memref<128x514xf32, #tpu.memory_space<vmem>>, vector<128x514xf32>
    %cst_110 = arith.constant dense<0.000000e+00> : vector<2x514xf32>
    %210 = tpu.matmul %208, %209, %cst_110 {dimension_numbers = #tpu.dot_dimension_numbers<[1], [0], [0], [1], [0, 0, 1, 1], [], []>} : vector<2x128xf32>, vector<128x514xf32>, vector<2x514xf32> -> vector<2x514xf32>
    %c0_111 = arith.constant 0 : index
    %c0_112 = arith.constant 0 : index
    %211 = vector.load %arg24[%c0_111, %c0_112] : memref<1x514xf32, #tpu.memory_space<vmem>>, vector<1x514xf32>
    %212 = vector.broadcast %211 : vector<1x514xf32> to vector<2x514xf32>
    %213 = arith.addf %210, %212 : vector<2x514xf32>
    %c0_113 = arith.constant 0 : index
    %c0_114 = arith.constant 0 : index
    %214 = vector.load %arg25[%c0_113, %c0_114] : memref<1x514xf32, #tpu.memory_space<vmem>>, vector<1x514xf32>
    %215 = vector.broadcast %214 : vector<1x514xf32> to vector<2x514xf32>
    %216 = arith.mulf %213, %215 : vector<2x514xf32>
    %c0_115 = arith.constant 0 : index
    %c0_116 = arith.constant 0 : index
    %217 = vector.load %arg26[%c0_115, %c0_116] : memref<1x514xf32, #tpu.memory_space<vmem>>, vector<1x514xf32>
    %218 = vector.broadcast %217 : vector<1x514xf32> to vector<2x514xf32>
    %219 = arith.addf %216, %218 : vector<2x514xf32>
    %c0_117 = arith.constant 0 : index
    %c0_118 = arith.constant 0 : index
    %220 = vector.load %arg27[%c0_117, %c0_118] : memref<2x514xf32, #tpu.memory_space<vmem>>, vector<2x514xf32>
    tpu.vector_store %arg27[%c0_117, %c0_118], %219 {strides = array<i32>} : memref<2x514xf32, #tpu.memory_space<vmem>>, vector<2x514xf32>,
    return
  }
  func.func @transform_0(%arg0: i32) -> (i32, i32) {
    %c0_i32 = arith.constant 0 : i32
    %c0_i32_0 = arith.constant 0 : i32
    %c0_i32_1 = arith.constant 0 : i32
    return %c0_i32, %c0_i32_0 : i32, i32
  }
  func.func @transform_1(%arg0: i32) -> (i32, i32) {
    %c0_i32 = arith.constant 0 : i32
    %c0_i32_0 = arith.constant 0 : i32
    %c0_i32_1 = arith.constant 0 : i32
    return %c0_i32, %c0_i32_0 : i32, i32
  }
  func.func @transform_2(%arg0: i32) -> (i32, i32) {
    %c0_i32 = arith.constant 0 : i32
    %c0_i32_0 = arith.constant 0 : i32
    %c0_i32_1 = arith.constant 0 : i32
    return %c0_i32, %c0_i32_0 : i32, i32
  }
  func.func @transform_3(%arg0: i32) -> (i32, i32) {
    %c0_i32 = arith.constant 0 : i32
    %c0_i32_0 = arith.constant 0 : i32
    %c0_i32_1 = arith.constant 0 : i32
    return %c0_i32, %c0_i32_0 : i32, i32
  }
  func.func @transform_4(%arg0: i32) -> (i32, i32) {
    %c0_i32 = arith.constant 0 : i32
    %c0_i32_0 = arith.constant 0 : i32
    %c0_i32_1 = arith.constant 0 : i32
    return %c0_i32, %c0_i32_0 : i32, i32
  }
  func.func @transform_5(%arg0: i32) -> (i32, i32) {
    %c0_i32 = arith.constant 0 : i32
    %c0_i32_0 = arith.constant 0 : i32
    %c0_i32_1 = arith.constant 0 : i32
    return %c0_i32, %c0_i32_0 : i32, i32
  }
  func.func @transform_6(%arg0: i32) -> (i32, i32) {
    %c0_i32 = arith.constant 0 : i32
    %c0_i32_0 = arith.constant 0 : i32
    %c0_i32_1 = arith.constant 0 : i32
    return %c0_i32, %c0_i32_0 : i32, i32
  }
  func.func @transform_7(%arg0: i32) -> (i32, i32) {
    %c0_i32 = arith.constant 0 : i32
    %c0_i32_0 = arith.constant 0 : i32
    %c0_i32_1 = arith.constant 0 : i32
    return %c0_i32, %c0_i32_0 : i32, i32
  }
  func.func @transform_8(%arg0: i32) -> (i32, i32) {
    %c0_i32 = arith.constant 0 : i32
    %c0_i32_0 = arith.constant 0 : i32
    %c0_i32_1 = arith.constant 0 : i32
    return %c0_i32, %c0_i32_0 : i32, i32
  }
  func.func @transform_9(%arg0: i32) -> (i32, i32) {
    %c0_i32 = arith.constant 0 : i32
    %c0_i32_0 = arith.constant 0 : i32
    %c0_i32_1 = arith.constant 0 : i32
    return %c0_i32, %c0_i32_0 : i32, i32
  }
  func.func @transform_10(%arg0: i32) -> (i32, i32) {
    %c0_i32 = arith.constant 0 : i32
    %c0_i32_0 = arith.constant 0 : i32
    %c0_i32_1 = arith.constant 0 : i32
    return %c0_i32, %c0_i32_0 : i32, i32
  }
  func.func @transform_11(%arg0: i32) -> (i32, i32) {
    %c0_i32 = arith.constant 0 : i32
    %c0_i32_0 = arith.constant 0 : i32
    %c0_i32_1 = arith.constant 0 : i32
    return %c0_i32, %c0_i32_0 : i32, i32
  }
  func.func @transform_12(%arg0: i32) -> (i32, i32) {
    %c0_i32 = arith.constant 0 : i32
    %c0_i32_0 = arith.constant 0 : i32
    %c0_i32_1 = arith.constant 0 : i32
    return %c0_i32, %c0_i32_0 : i32, i32
  }
  func.func @transform_13(%arg0: i32) -> (i32, i32) {
    %c0_i32 = arith.constant 0 : i32
    %c0_i32_0 = arith.constant 0 : i32
    %c0_i32_1 = arith.constant 0 : i32
    return %c0_i32, %c0_i32_0 : i32, i32
  }
  func.func @transform_14(%arg0: i32) -> (i32, i32) {
    %c0_i32 = arith.constant 0 : i32
    %c0_i32_0 = arith.constant 0 : i32
    %c0_i32_1 = arith.constant 0 : i32
    return %c0_i32, %c0_i32_0 : i32, i32
  }
  func.func @transform_15(%arg0: i32) -> (i32, i32) {
    %c0_i32 = arith.constant 0 : i32
    %c0_i32_0 = arith.constant 0 : i32
    %c0_i32_1 = arith.constant 0 : i32
    return %c0_i32, %c0_i32_0 : i32, i32
  }
  func.func @transform_16(%arg0: i32) -> (i32, i32) {
    %c0_i32 = arith.constant 0 : i32
    %c0_i32_0 = arith.constant 0 : i32
    %c0_i32_1 = arith.constant 0 : i32
    return %c0_i32, %c0_i32_0 : i32, i32
  }
  func.func @transform_17(%arg0: i32) -> (i32, i32) {
    %c0_i32 = arith.constant 0 : i32
    %c0_i32_0 = arith.constant 0 : i32
    %c0_i32_1 = arith.constant 0 : i32
    return %c0_i32, %c0_i32_0 : i32, i32
  }
  func.func @transform_18(%arg0: i32) -> (i32, i32) {
    %c0_i32 = arith.constant 0 : i32
    %c0_i32_0 = arith.constant 0 : i32
    %c0_i32_1 = arith.constant 0 : i32
    return %c0_i32, %c0_i32_0 : i32, i32
  }
  func.func @transform_19(%arg0: i32) -> (i32, i32) {
    %c0_i32 = arith.constant 0 : i32
    %c0_i32_0 = arith.constant 0 : i32
    %c0_i32_1 = arith.constant 0 : i32
    return %c0_i32, %c0_i32_0 : i32, i32
  }
  func.func @transform_20(%arg0: i32) -> (i32, i32) {
    %c0_i32 = arith.constant 0 : i32
    %c0_i32_0 = arith.constant 0 : i32
    %c0_i32_1 = arith.constant 0 : i32
    return %c0_i32, %c0_i32_0 : i32, i32
  }
  func.func @transform_21(%arg0: i32) -> (i32, i32) {
    %c0_i32 = arith.constant 0 : i32
    %c0_i32_0 = arith.constant 0 : i32
    %c0_i32_1 = arith.constant 0 : i32
    return %c0_i32, %c0_i32_0 : i32, i32
  }
  func.func @transform_22(%arg0: i32) -> (i32, i32) {
    %c0_i32 = arith.constant 0 : i32
    %c0_i32_0 = arith.constant 0 : i32
    %c0_i32_1 = arith.constant 0 : i32
    return %c0_i32, %c0_i32_0 : i32, i32
  }
  func.func @transform_23(%arg0: i32) -> (i32, i32) {
    %c0_i32 = arith.constant 0 : i32
    %c0_i32_0 = arith.constant 0 : i32
    %c0_i32_1 = arith.constant 0 : i32
    return %c0_i32, %c0_i32_0 : i32, i32
  }
  func.func @transform_24(%arg0: i32) -> (i32, i32) {
    %c0_i32 = arith.constant 0 : i32
    %c0_i32_0 = arith.constant 0 : i32
    %c0_i32_1 = arith.constant 0 : i32
    return %c0_i32, %c0_i32_0 : i32, i32
  }
  func.func @transform_25(%arg0: i32) -> (i32, i32) {
    %c0_i32 = arith.constant 0 : i32
    %c0_i32_0 = arith.constant 0 : i32
    %c0_i32_1 = arith.constant 0 : i32
    return %c0_i32, %c0_i32_0 : i32, i32
  }
  func.func @transform_26(%arg0: i32) -> (i32, i32) {
    %c0_i32 = arith.constant 0 : i32
    %c0_i32_0 = arith.constant 0 : i32
    %c0_i32_1 = arith.constant 0 : i32
    return %c0_i32, %c0_i32_0 : i32, i32
  }
}

</mosaic_0001>

<llo_original>
// kernel: diff_ab_parsec_forward.1
$region0: #{diff_ab_parsec_forward.1}
  #allocation0 [shape = 'u32[]', space=smem, size = 0x4, offset = 0x4, fixed_abs, tag = 'smem constant byte address 0x4 - core index']
  #allocation1 [shape = 'u32[72,128]{1,0:T(1,128)}', space=vmem, size = 0x9000, scoped, tag = 'internal scratch']
  %s0 = inlined_call_operand.vmem [shape: f32[2,11], index: 0, kind: input, shape index: {}]
  %s1 = inlined_call_operand.vmem [shape: f32[2,11], index: 1, kind: input, shape index: {}]
  %s2 = inlined_call_operand.vmem [shape: f32[2,52], index: 2, kind: input, shape index: {}]
  %s3 = inlined_call_operand.vmem [shape: f32[2,32], index: 3, kind: input, shape index: {}]
  %s4 = inlined_call_operand.hbm [shape: f32[8,16], index: 4, kind: input, shape index: {}]
  %s5 = inlined_call_operand.hbm [shape: f32[11,64], index: 5, kind: input, shape index: {}]
  %s6 = inlined_call_operand.hbm [shape: f32[11,64], index: 6, kind: input, shape index: {}]
  %s7 = inlined_call_operand.hbm [shape: f32[52,64], index: 7, kind: input, shape index: {}]
  %s8 = inlined_call_operand.vmem [shape: f32[1,64], index: 8, kind: input, shape index: {}]
  %s9 = inlined_call_operand.hbm [shape: f32[64,52], index: 9, kind: input, shape index: {}]
  %s10 = inlined_call_operand.vmem [shape: f32[1,52], index: 10, kind: input, shape index: {}]
  %s11 = inlined_call_operand.hbm [shape: f32[1,52], index: 11, kind: input, shape index: {}]
  %s12 = inlined_call_operand.hbm [shape: f32[1,52], index: 12, kind: input, shape index: {}]
  %s13 = inlined_call_operand.hbm [shape: f32[32,128], index: 13, kind: input, shape index: {}]
  %s14 = inlined_call_operand.vmem [shape: f32[16,128], index: 14, kind: input, shape index: {}]
  %s15 = inlined_call_operand.vmem [shape: f32[11,128], index: 15, kind: input, shape index: {}]
  %s16 = inlined_call_operand.hbm [shape: f32[52,128], index: 16, kind: input, shape index: {}]
  %s17 = inlined_call_operand.vmem [shape: f32[1,128], index: 17, kind: input, shape index: {}, may-alias: {17,21}]
  %s18 = inlined_call_operand.vmem [shape: f32[128,32], index: 18, kind: input, shape index: {}]
  %s19 = inlined_call_operand.vmem [shape: f32[1,32], index: 19, kind: input, shape index: {}]
  %s20 = inlined_call_operand.hbm [shape: f32[32,128], index: 20, kind: input, shape index: {}]
  %s21 = inlined_call_operand.vmem [shape: f32[1,128], index: 21, kind: input, shape index: {}, may-alias: {17,21}]
  %s22 = inlined_call_operand.hbm [shape: f32[128,514], index: 22, kind: input, shape index: {}]
  %s23 = inlined_call_operand.vmem [shape: f32[1,514], index: 23, kind: input, shape index: {}]
  %s24 = inlined_call_operand.hbm [shape: f32[1,514], index: 24, kind: input, shape index: {}]
  %s25 = inlined_call_operand.vmem [shape: f32[1,514], index: 25, kind: input, shape index: {}]
  %s26 = inlined_call_operand.vmem [shape: f32[2,514], index: 26, kind: output, shape index: {}]
  %s27 = sld [smem:[#allocation0]]
  $region162: #{diff_ab_parsec_forward.1} parent=0
    _
  %s29 = ssub.s32 1, %s27
  %s30 = scalar_select 0, %s29, %s27
  $region1: #{diff_ab_parsec_forward.1} parent=0
    #allocation2 [shape = 'u8[4096]{0}', space=vmem, size = 0x1000, scoped, tag = 'input window, operand 4, single buffered']
    #allocation3 [shape = 's32[1]{0}', space=sflag, size = 0x4, scoped, tag = 'scoped memory for diff_ab_parsec_forward.1']
    #allocation4 [shape = 'u8[8192]{0}', space=vmem, size = 0x2000, scoped, tag = 'input window, operand 5, single buffered']
    #allocation5 [shape = 's32[1]{0}', space=sflag, size = 0x4, scoped, tag = 'scoped memory for diff_ab_parsec_forward.1']
    #allocation6 [shape = 'u8[8192]{0}', space=vmem, size = 0x2000, scoped, tag = 'input window, operand 6, single buffered']
    #allocation7 [shape = 'u8[28672]{0}', space=vmem, size = 0x7000, scoped, tag = 'input window, operand 7, single buffered']
    #allocation8 [shape = 's32[1]{0}', space=sflag, size = 0x4, scoped, tag = 'scoped memory for diff_ab_parsec_forward.1']
    #allocation9 [shape = 'u8[32768]{0}', space=vmem, size = 0x8000, scoped, tag = 'input window, operand 9, single buffered']
    #allocation10 [shape = 'u8[512]{0}', space=vmem, size = 0x400, scoped, tag = 'input window, operand 11, single buffered']
    #allocation11 [shape = 's32[1]{0}', space=sflag, size = 0x4, scoped, tag = 'scoped memory for diff_ab_parsec_forward.1']
    #allocation12 [shape = 'u8[512]{0}', space=vmem, size = 0x400, scoped, tag = 'input window, operand 12, single buffered']
    #allocation13 [shape = 'u8[16384]{0}', space=vmem, size = 0x4000, scoped, tag = 'input window, operand 13, single buffered']
    #allocation14 [shape = 's32[1]{0}', space=sflag, size = 0x4, scoped, tag = 'scoped memory for diff_ab_parsec_forward.1']
    #allocation15 [shape = 'u8[28672]{0}', space=vmem, size = 0x7000, scoped, tag = 'input window, operand 16, single buffered']
    #allocation16 [shape = 'u8[16384]{0}', space=vmem, size = 0x4000, scoped, tag = 'input window, operand 20, single buffered']
    #allocation17 [shape = 's32[1]{0}', space=sflag, size = 0x4, scoped, tag = 'scoped memory for diff_ab_parsec_forward.1']
    #allocation18 [shape = 'u8[327680]{0}', space=vmem, size = 0x50000, scoped, tag = 'input window, operand 22, single buffered']
    #allocation19 [shape = 'u8[2560]{0}', space=vmem, size = 0xc00, scoped, tag = 'input window, operand 24, single buffered']
    #allocation20 [shape = 's32[1]{0}', space=sflag, size = 0x4, scoped, tag = 'scoped memory for diff_ab_parsec_forward.1']
    %31 = vsyncpa [#allocation3], 0
    %32 = vsyncpa [#allocation5], 0
    %33 = vsyncpa [#allocation8], 0
    %34 = vsyncpa [#allocation11], 0
    %35 = vsyncpa [#allocation14], 0
    %36 = vsyncpa [#allocation17], 0
    %37 = vsyncpa [#allocation20], 0
    // Predicated region
    $region2: #{diff_ab_parsec_forward.1} parent=1 // pred_check
      _
    $region3: #{diff_ab_parsec_forward.1} parent=1 // pred_check_branch
      %39 = sbr.rel (0) target = $region5
    $region4: #{diff_ab_parsec_forward.1} parent=1 // pred_region
      _
    $region5: #{diff_ab_parsec_forward.1} parent=1 // pred_fallthru
      _
    // Predicated region
    $region6: #{diff_ab_parsec_forward.1} parent=1 // pred_check
      _
    $region7: #{diff_ab_parsec_forward.1} parent=1 // pred_check_branch
      %41 = sbr.rel (0) target = $region9
    $region8: #{diff_ab_parsec_forward.1} parent=1 // pred_region
      _
    $region9: #{diff_ab_parsec_forward.1} parent=1 // pred_fallthru
      _
    // Predicated region
    $region10: #{diff_ab_parsec_forward.1} parent=1 // pred_check
      _
    $region11: #{diff_ab_parsec_forward.1} parent=1 // pred_check_branch
      %43 = sbr.rel (0) target = $region13
    $region12: #{diff_ab_parsec_forward.1} parent=1 // pred_region
      _
    $region13: #{diff_ab_parsec_forward.1} parent=1 // pred_fallthru
      _
    // Predicated region
    $region14: #{diff_ab_parsec_forward.1} parent=1 // pred_check
      _
    $region15: #{diff_ab_parsec_forward.1} parent=1 // pred_check_branch
      %45 = sbr.rel (0) target = $region17
    $region16: #{diff_ab_parsec_forward.1} parent=1 // pred_region
      _
    $region17: #{diff_ab_parsec_forward.1} parent=1 // pred_fallthru
      _
    // Predicated region
    $region18: #{diff_ab_parsec_forward.1} parent=1 // pred_check
      _
    $region19: #{diff_ab_parsec_forward.1} parent=1 // pred_check_branch
      %47 = sbr.rel (0) target = $region21
    $region20: #{diff_ab_parsec_forward.1} parent=1 // pred_region
      %49 = vsyncadd [#allocation3], 0
      %s51 = sshll.u32 %s4, 4
      %s52 = int_to_ptr.hbm [resolvable:$true] %s51
      %s53 = sshll.u32 [#allocation2], 4
      %s54 = int_to_ptr.vmem [resolvable:$true] %s53
      %56 = dma.hbm_to_vmem [thread:$0]  %s52, 128, %s54, [#allocation3]
    $region21: #{diff_ab_parsec_forward.1} parent=1 // pred_fallthru
      _
    // Predicated region
    $region22: #{diff_ab_parsec_forward.1} parent=1 // pred_check
      _
    $region23: #{diff_ab_parsec_forward.1} parent=1 // pred_check_branch
      %58 = sbr.rel (0) target = $region25
    $region24: #{diff_ab_parsec_forward.1} parent=1 // pred_region
      %60 = vsyncadd [#allocation5], 0
      %s61 = sshll.u32 %s5, 4
      %s62 = int_to_ptr.hbm [resolvable:$true] %s61
      %s63 = sshll.u32 [#allocation4], 4
      %s64 = int_to_ptr.vmem [resolvable:$true] %s63
      %69 = dma.hbm_to_vmem [thread:$0]  %s62, 256, %s64, [#allocation5], 128, 128, 8
    $region25: #{diff_ab_parsec_forward.1} parent=1 // pred_fallthru
      _
    // Predicated region
    $region26: #{diff_ab_parsec_forward.1} parent=1 // pred_check
      _
    $region27: #{diff_ab_parsec_forward.1} parent=1 // pred_check_branch
      %71 = sbr.rel (0) target = $region29
    $region28: #{diff_ab_parsec_forward.1} parent=1 // pred_region
      %73 = vsyncadd [#allocation5], 0
      %s74 = sshll.u32 %s6, 4
      %s75 = int_to_ptr.hbm [resolvable:$true] %s74
      %s76 = sshll.u32 [#allocation6], 4
      %s77 = int_to_ptr.vmem [resolvable:$true] %s76
      %82 = dma.hbm_to_vmem [thread:$0]  %s75, 256, %s77, [#allocation5], 128, 128, 8
    $region29: #{diff_ab_parsec_forward.1} parent=1 // pred_fallthru
      _
    // Predicated region
    $region30: #{diff_ab_parsec_forward.1} parent=1 // pred_check
      _
    $region31: #{diff_ab_parsec_forward.1} parent=1 // pred_check_branch
      %84 = sbr.rel (0) target = $region33
    $region32: #{diff_ab_parsec_forward.1} parent=1 // pred_region
      %86 = vsyncadd [#allocation8], 0
      %s87 = sshll.u32 %s7, 4
      %s88 = int_to_ptr.hbm [resolvable:$true] %s87
      %s89 = sshll.u32 [#allocation7], 4
      %s90 = int_to_ptr.vmem [resolvable:$true] %s89
      %95 = dma.hbm_to_vmem [thread:$0]  %s88, 896, %s90, [#allocation8], 128, 128, 8
    $region33: #{diff_ab_parsec_forward.1} parent=1 // pred_fallthru
      _
    // Predicated region
    $region34: #{diff_ab_parsec_forward.1} parent=1 // pred_check
      _
    $region35: #{diff_ab_parsec_forward.1} parent=1 // pred_check_branch
      %97 = sbr.rel (0) target = $region37
    $region36: #{diff_ab_parsec_forward.1} parent=1 // pred_region
      _
    $region37: #{diff_ab_parsec_forward.1} parent=1 // pred_fallthru
      _
    // Predicated region
    $region38: #{diff_ab_parsec_forward.1} parent=1 // pred_check
      _
    $region39: #{diff_ab_parsec_forward.1} parent=1 // pred_check_branch
      %99 = sbr.rel (0) target = $region41
    $region40: #{diff_ab_parsec_forward.1} parent=1 // pred_region
      %101 = vsyncadd [#allocation8], 0
      %s102 = sshll.u32 %s9, 4
      %s103 = int_to_ptr.hbm [resolvable:$true] %s102
      %s104 = sshll.u32 [#allocation9], 4
      %s105 = int_to_ptr.vmem [resolvable:$true] %s104
      %110 = dma.hbm_to_vmem [thread:$0]  %s103, 1024, %s105, [#allocation8], 128, 128, 8
    $region41: #{diff_ab_parsec_forward.1} parent=1 // pred_fallthru
      _
    // Predicated region
    $region42: #{diff_ab_parsec_forward.1} parent=1 // pred_check
      _
    $region43: #{diff_ab_parsec_forward.1} parent=1 // pred_check_branch
      %112 = sbr.rel (0) target = $region45
    $region44: #{diff_ab_parsec_forward.1} parent=1 // pred_region
      _
    $region45: #{diff_ab_parsec_forward.1} parent=1 // pred_fallthru
      _
    // Predicated region
    $region46: #{diff_ab_parsec_forward.1} parent=1 // pred_check
      _
    $region47: #{diff_ab_parsec_forward.1} parent=1 // pred_check_branch
      %114 = sbr.rel (0) target = $region49
    $region48: #{diff_ab_parsec_forward.1} parent=1 // pred_region
      %116 = vsyncadd [#allocation11], 0
      %s118 = sshll.u32 %s11, 4
      %s119 = int_to_ptr.hbm [resolvable:$true] %s118
      %s120 = sshll.u32 [#allocation10], 4
      %s121 = int_to_ptr.vmem [resolvable:$true] %s120
      %123 = dma.hbm_to_vmem [thread:$0]  %s119, 16, %s121, [#allocation11]
    $region49: #{diff_ab_parsec_forward.1} parent=1 // pred_fallthru
      _
    // Predicated region
    $region50: #{diff_ab_parsec_forward.1} parent=1 // pred_check
      _
    $region51: #{diff_ab_parsec_forward.1} parent=1 // pred_check_branch
      %125 = sbr.rel (0) target = $region53
    $region52: #{diff_ab_parsec_forward.1} parent=1 // pred_region
      %127 = vsyncadd [#allocation11], 0
      %s129 = sshll.u32 %s12, 4
      %s130 = int_to_ptr.hbm [resolvable:$true] %s129
      %s131 = sshll.u32 [#allocation12], 4
      %s132 = int_to_ptr.vmem [resolvable:$true] %s131
      %134 = dma.hbm_to_vmem [thread:$0]  %s130, 16, %s132, [#allocation11]
    $region53: #{diff_ab_parsec_forward.1} parent=1 // pred_fallthru
      _
    // Predicated region
    $region54: #{diff_ab_parsec_forward.1} parent=1 // pred_check
      _
    $region55: #{diff_ab_parsec_forward.1} parent=1 // pred_check_branch
      %136 = sbr.rel (0) target = $region57
    $region56: #{diff_ab_parsec_forward.1} parent=1 // pred_region
      %138 = vsyncadd [#allocation14], 0
      %s139 = sshll.u32 %s13, 4
      %s140 = int_to_ptr.hbm [resolvable:$true] %s139
      %s141 = sshll.u32 [#allocation13], 4
      %s142 = int_to_ptr.vmem [resolvable:$true] %s141
      %147 = dma.hbm_to_vmem [thread:$0]  %s140, 512, %s142, [#allocation14], 128, 128, 8
    $region57: #{diff_ab_parsec_forward.1} parent=1 // pred_fallthru
      _
    // Predicated region
    $region58: #{diff_ab_parsec_forward.1} parent=1 // pred_check
      _
    $region59: #{diff_ab_parsec_forward.1} parent=1 // pred_check_branch
      %149 = sbr.rel (0) target = $region61
    $region60: #{diff_ab_parsec_forward.1} parent=1 // pred_region
      _
    $region61: #{diff_ab_parsec_forward.1} parent=1 // pred_fallthru
      _
    // Predicated region
    $region62: #{diff_ab_parsec_forward.1} parent=1 // pred_check
      _
    $region63: #{diff_ab_parsec_forward.1} parent=1 // pred_check_branch
      %151 = sbr.rel (0) target = $region65
    $region64: #{diff_ab_parsec_forward.1} parent=1 // pred_region
      _
    $region65: #{diff_ab_parsec_forward.1} parent=1 // pred_fallthru
      _
    // Predicated region
    $region66: #{diff_ab_parsec_forward.1} parent=1 // pred_check
      _
    $region67: #{diff_ab_parsec_forward.1} parent=1 // pred_check_branch
      %153 = sbr.rel (0) target = $region69
    $region68: #{diff_ab_parsec_forward.1} parent=1 // pred_region
      %155 = vsyncadd [#allocation14], 0
      %s156 = sshll.u32 %s16, 4
      %s157 = int_to_ptr.hbm [resolvable:$true] %s156
      %s158 = sshll.u32 [#allocation15], 4
      %s159 = int_to_ptr.vmem [resolvable:$true] %s158
      %164 = dma.hbm_to_vmem [thread:$0]  %s157, 896, %s159, [#allocation14], 128, 128, 8
    $region69: #{diff_ab_parsec_forward.1} parent=1 // pred_fallthru
      _
    // Predicated region
    $region70: #{diff_ab_parsec_forward.1} parent=1 // pred_check
      _
    $region71: #{diff_ab_parsec_forward.1} parent=1 // pred_check_branch
      %166 = sbr.rel (0) target = $region73
    $region72: #{diff_ab_parsec_forward.1} parent=1 // pred_region
      _
    $region73: #{diff_ab_parsec_forward.1} parent=1 // pred_fallthru
      _
    // Predicated region
    $region74: #{diff_ab_parsec_forward.1} parent=1 // pred_check
      _
    $region75: #{diff_ab_parsec_forward.1} parent=1 // pred_check_branch
      %168 = sbr.rel (0) target = $region77
    $region76: #{diff_ab_parsec_forward.1} parent=1 // pred_region
      _
    $region77: #{diff_ab_parsec_forward.1} parent=1 // pred_fallthru
      _
    // Predicated region
    $region78: #{diff_ab_parsec_forward.1} parent=1 // pred_check
      _
    $region79: #{diff_ab_parsec_forward.1} parent=1 // pred_check_branch
      %170 = sbr.rel (0) target = $region81
    $region80: #{diff_ab_parsec_forward.1} parent=1 // pred_region
      _
    $region81: #{diff_ab_parsec_forward.1} parent=1 // pred_fallthru
      _
    // Predicated region
    $region82: #{diff_ab_parsec_forward.1} parent=1 // pred_check
      _
    $region83: #{diff_ab_parsec_forward.1} parent=1 // pred_check_branch
      %172 = sbr.rel (0) target = $region85
    $region84: #{diff_ab_parsec_forward.1} parent=1 // pred_region
      %174 = vsyncadd [#allocation17], 0
      %s175 = sshll.u32 %s20, 4
      %s176 = int_to_ptr.hbm [resolvable:$true] %s175
      %s177 = sshll.u32 [#allocation16], 4
      %s178 = int_to_ptr.vmem [resolvable:$true] %s177
      %183 = dma.hbm_to_vmem [thread:$0]  %s176, 512, %s178, [#allocation17], 128, 128, 8
    $region85: #{diff_ab_parsec_forward.1} parent=1 // pred_fallthru
      _
    // Predicated region
    $region86: #{diff_ab_parsec_forward.1} parent=1 // pred_check
      _
    $region87: #{diff_ab_parsec_forward.1} parent=1 // pred_check_branch
      %185 = sbr.rel (0) target = $region89
    $region88: #{diff_ab_parsec_forward.1} parent=1 // pred_region
      _
    $region89: #{diff_ab_parsec_forward.1} parent=1 // pred_fallthru
      _
    // Predicated region
    $region90: #{diff_ab_parsec_forward.1} parent=1 // pred_check
      _
    $region91: #{diff_ab_parsec_forward.1} parent=1 // pred_check_branch
      %187 = sbr.rel (0) target = $region93
    $region92: #{diff_ab_parsec_forward.1} parent=1 // pred_region
      %189 = vsyncadd [#allocation17], 0
      %s190 = sshll.u32 %s22, 4
      %s191 = int_to_ptr.hbm [resolvable:$true] %s190
      %s192 = sshll.u32 [#allocation18], 4
      %s193 = int_to_ptr.vmem [resolvable:$true] %s192
      %198 = dma.hbm_to_vmem [thread:$0]  %s191, 10240, %s193, [#allocation17], 640, 640, 40
    $region93: #{diff_ab_parsec_forward.1} parent=1 // pred_fallthru
      _
    // Predicated region
    $region94: #{diff_ab_parsec_forward.1} parent=1 // pred_check
      _
    $region95: #{diff_ab_parsec_forward.1} parent=1 // pred_check_branch
      %200 = sbr.rel (0) target = $region97
    $region96: #{diff_ab_parsec_forward.1} parent=1 // pred_region
      _
    $region97: #{diff_ab_parsec_forward.1} parent=1 // pred_fallthru
      _
    // Predicated region
    $region98: #{diff_ab_parsec_forward.1} parent=1 // pred_check
      _
    $region99: #{diff_ab_parsec_forward.1} parent=1 // pred_check_branch
      %202 = sbr.rel (0) target = $region101
    $region100: #{diff_ab_parsec_forward.1} parent=1 // pred_region
      %204 = vsyncadd [#allocation20], 0
      %s206 = sshll.u32 %s24, 4
      %s207 = int_to_ptr.hbm [resolvable:$true] %s206
      %s208 = sshll.u32 [#allocation19], 4
      %s209 = int_to_ptr.vmem [resolvable:$true] %s208
      %211 = dma.hbm_to_vmem [thread:$0]  %s207, 80, %s209, [#allocation20]
    $region101: #{diff_ab_parsec_forward.1} parent=1 // pred_fallthru
      _
    // Predicated region
    $region102: #{diff_ab_parsec_forward.1} parent=1 // pred_check
      _
    $region103: #{diff_ab_parsec_forward.1} parent=1 // pred_check_branch
      %213 = sbr.rel (0) target = $region105
    $region104: #{diff_ab_parsec_forward.1} parent=1 // pred_region
      _
    $region105: #{diff_ab_parsec_forward.1} parent=1 // pred_fallthru
      _
    // Predicated region
    $region106: #{diff_ab_parsec_forward.1} parent=1 // pred_check
      _
    $region107: #{diff_ab_parsec_forward.1} parent=1 // pred_check_branch
      %215 = sbr.rel (0) target = $region109
    $region108: #{diff_ab_parsec_forward.1} parent=1 // pred_region
      %217 = dma.done [#allocation3], 128
    $region109: #{diff_ab_parsec_forward.1} parent=1 // pred_fallthru
      _
    // Predicated region
    $region110: #{diff_ab_parsec_forward.1} parent=1 // pred_check
      _
    $region111: #{diff_ab_parsec_forward.1} parent=1 // pred_check_branch
      %219 = sbr.rel (0) target = $region113
    $region112: #{diff_ab_parsec_forward.1} parent=1 // pred_region
      %221 = dma.done [#allocation5], 256
    $region113: #{diff_ab_parsec_forward.1} parent=1 // pred_fallthru
      _
    // Predicated region
    $region114: #{diff_ab_parsec_forward.1} parent=1 // pred_check
      _
    $region115: #{diff_ab_parsec_forward.1} parent=1 // pred_check_branch
      %223 = sbr.rel (0) target = $region117
    $region116: #{diff_ab_parsec_forward.1} parent=1 // pred_region
      %225 = dma.done [#allocation5], 256
    $region117: #{diff_ab_parsec_forward.1} parent=1 // pred_fallthru
      _
    // Predicated region
    $region118: #{diff_ab_parsec_forward.1} parent=1 // pred_check
      _
    $region119: #{diff_ab_parsec_forward.1} parent=1 // pred_check_branch
      %227 = sbr.rel (0) target = $region121
    $region120: #{diff_ab_parsec_forward.1} parent=1 // pred_region
      %229 = dma.done [#allocation8], 896
    $region121: #{diff_ab_parsec_forward.1} parent=1 // pred_fallthru
      _
    // Predicated region
    $region122: #{diff_ab_parsec_forward.1} parent=1 // pred_check
      _
    $region123: #{diff_ab_parsec_forward.1} parent=1 // pred_check_branch
      %231 = sbr.rel (0) target = $region125
    $region124: #{diff_ab_parsec_forward.1} parent=1 // pred_region
      %233 = dma.done [#allocation8], 1024
    $region125: #{diff_ab_parsec_forward.1} parent=1 // pred_fallthru
      _
    // Predicated region
    $region126: #{diff_ab_parsec_forward.1} parent=1 // pred_check
      _
    $region127: #{diff_ab_parsec_forward.1} parent=1 // pred_check_branch
      %235 = sbr.rel (0) target = $region129
    $region128: #{diff_ab_parsec_forward.1} parent=1 // pred_region
      %237 = dma.done [#allocation11], 16
    $region129: #{diff_ab_parsec_forward.1} parent=1 // pred_fallthru
      _
    // Predicated region
    $region130: #{diff_ab_parsec_forward.1} parent=1 // pred_check
      _
    $region131: #{diff_ab_parsec_forward.1} parent=1 // pred_check_branch
      %239 = sbr.rel (0) target = $region133
    $region132: #{diff_ab_parsec_forward.1} parent=1 // pred_region
      %241 = dma.done [#allocation11], 16
    $region133: #{diff_ab_parsec_forward.1} parent=1 // pred_fallthru
      _
    // Predicated region
    $region134: #{diff_ab_parsec_forward.1} parent=1 // pred_check
      _
    $region135: #{diff_ab_parsec_forward.1} parent=1 // pred_check_branch
      %243 = sbr.rel (0) target = $region137
    $region136: #{diff_ab_parsec_forward.1} parent=1 // pred_region
      %245 = dma.done [#allocation14], 512
    $region137: #{diff_ab_parsec_forward.1} parent=1 // pred_fallthru
      _
    // Predicated region
    $region138: #{diff_ab_parsec_forward.1} parent=1 // pred_check
      _
    $region139: #{diff_ab_parsec_forward.1} parent=1 // pred_check_branch
      %247 = sbr.rel (0) target = $region141
    $region140: #{diff_ab_parsec_forward.1} parent=1 // pred_region
      %249 = dma.done [#allocation14], 896
    $region141: #{diff_ab_parsec_forward.1} parent=1 // pred_fallthru
      _
    // Predicated region
    $region142: #{diff_ab_parsec_forward.1} parent=1 // pred_check
      _
    $region143: #{diff_ab_parsec_forward.1} parent=1 // pred_check_branch
      %251 = sbr.rel (0) target = $region145
    $region144: #{diff_ab_parsec_forward.1} parent=1 // pred_region
      %253 = dma.done [#allocation17], 512
    $region145: #{diff_ab_parsec_forward.1} parent=1 // pred_fallthru
      _
    // Predicated region
    $region146: #{diff_ab_parsec_forward.1} parent=1 // pred_check
      _
    $region147: #{diff_ab_parsec_forward.1} parent=1 // pred_check_branch
      %255 = sbr.rel (0) target = $region149
    $region148: #{diff_ab_parsec_forward.1} parent=1 // pred_region
      %257 = dma.done [#allocation17], 10240
    $region149: #{diff_ab_parsec_forward.1} parent=1 // pred_fallthru
      _
    // Predicated region
    $region150: #{diff_ab_parsec_forward.1} parent=1 // pred_check
      _
    $region151: #{diff_ab_parsec_forward.1} parent=1 // pred_check_branch
      %259 = sbr.rel (0) target = $region153
    $region152: #{diff_ab_parsec_forward.1} parent=1 // pred_region
      %261 = dma.done [#allocation20], 80
    $region153: #{diff_ab_parsec_forward.1} parent=1 // pred_fallthru
      _
    %v262 = vld [vmem:[%s0] sm:$0x3]
    %v263 = vld [vmem:[%s1] sm:$0x3]
    %v264 = vld [vmem:[%s2] sm:$0x3]
    %v265 = vld [vmem:[#allocation4] sm:$0xff]
    %v266 = vld [vmem:[#allocation4 + $0x8] sm:$0x7]
    %v267 = vld [vmem:[#allocation6] sm:$0xff]
    %v268 = vld [vmem:[#allocation6 + $0x8] sm:$0x7]
    %vm269 = vcmask 89088
    %v271 = vsel %vm269, %v263, 0
    %vm273 = vcmask 1042432
    %v275 = vsel %vm273, %v268, 0
    %277 = vmatpush.msra.mxu0 0.0
    %278 = vmatpush.msra.mxu0 0.0
    %279 = vmatpush.msra.mxu0 0.0
    %280 = vmatpush.msra.mxu0 0.0
    %281 = vmatpush.msra.mxu0 0.0
    %282 = vmatpush.msra.mxu0 0.0
    %283 = vmatpush.msra.mxu0 0.0
    %284 = vmatpush.msra.mxu0 0.0
    %285 = vmatpush.msra.mxu0 0.0
    %286 = vmatpush.msra.mxu0 0.0
    %287 = vmatpush.msra.mxu0 0.0
    %288 = vmatpush.msra.mxu0 0.0
    %289 = vmatpush.msra.mxu0 0.0
    %290 = vmatpush.msra.mxu0 0.0
    %291 = vmatpush.msra.mxu0 %v275
    %292 = vmatpush.msra.mxu0 %v267
    %293 = vmatmul.f32.gmra.mxu0 %v271
    %v294 = vpop.f32.mrf.mxu0
    %v295 = vadd.f32 0.0, %v294
    %296 = vdwg.mxu0
    %v298 = vsel %vm269, %v262, 0
    %v301 = vsel %vm273, %v266, 0
    %303 = vmatpush.msra.mxu0 0.0
    %304 = vmatpush.msra.mxu0 0.0
    %305 = vmatpush.msra.mxu0 0.0
    %306 = vmatpush.msra.mxu0 0.0
    %307 = vmatpush.msra.mxu0 0.0
    %308 = vmatpush.msra.mxu0 0.0
    %309 = vmatpush.msra.mxu0 0.0
    %310 = vmatpush.msra.mxu0 0.0
    %311 = vmatpush.msra.mxu0 0.0
    %312 = vmatpush.msra.mxu0 0.0
    %313 = vmatpush.msra.mxu0 0.0
    %314 = vmatpush.msra.mxu0 0.0
    %315 = vmatpush.msra.mxu0 0.0
    %316 = vmatpush.msra.mxu0 0.0
    %317 = vmatpush.msra.mxu0 %v301
    %318 = vmatpush.msra.mxu0 %v265
    %319 = vmatmul.f32.gmra.mxu0 %v298
    %v320 = vpop.f32.mrf.mxu0
    %v321 = vadd.f32 %v295, %v320
    %322 = vdwg.mxu0
    %v323 = vld [vmem:[#allocation7] sm:$0xff]
    %v324 = vld [vmem:[#allocation7 + $0x8] sm:$0xff]
    %v325 = vld [vmem:[#allocation7 + $0x10] sm:$0xff]
    %v326 = vld [vmem:[#allocation7 + $0x18] sm:$0xff]
    %v327 = vld [vmem:[#allocation7 + $0x20] sm:$0xff]
    %v328 = vld [vmem:[#allocation7 + $0x28] sm:$0xff]
    %v329 = vld [vmem:[#allocation7 + $0x30] sm:$0xf]
    %vm330 = vcmask 424960
    %v332 = vsel %vm330, %v264, 0
    %vm334 = vcmask 1043456
    %v336 = vsel %vm334, %v329, 0
    %338 = vmatpush.msra.mxu0 0.0
    %339 = vmatpush.msra.mxu0 0.0
    %340 = vmatpush.msra.mxu0 0.0
    %341 = vmatpush.msra.mxu0 0.0
    %342 = vmatpush.msra.mxu0 0.0
    %343 = vmatpush.msra.mxu0 0.0
    %344 = vmatpush.msra.mxu0 0.0
    %345 = vmatpush.msra.mxu0 0.0
    %346 = vmatpush.msra.mxu0 0.0
    %347 = vmatpush.msra.mxu0 %v336
    %348 = vmatpush.msra.mxu0 %v328
    %349 = vmatpush.msra.mxu0 %v327
    %350 = vmatpush.msra.mxu0 %v326
    %351 = vmatpush.msra.mxu0 %v325
    %352 = vmatpush.msra.mxu0 %v324
    %353 = vmatpush.msra.mxu0 %v323
    %354 = vmatmul.f32.gmra.mxu0 %v332
    %v355 = vpop.f32.mrf.mxu0
    %v356 = vadd.f32 0.0, %v355
    %357 = vdwg.mxu0
    %v358 = vadd.f32 %v321, %v356
    %v359 = vld [vmem:[%s8] sm:$0x1]
    %v361 = vperm.slane %v359, 0
    %v363 = vadd.f32 %v358, %v361
    %v364 = vmax.f32 %v363, 0.0
    %v365 = vld [vmem:[#allocation9] sm:$0xff]
    %v366 = vld [vmem:[#allocation9 + $0x8] sm:$0xff]
    %v367 = vld [vmem:[#allocation9 + $0x10] sm:$0xff]
    %v368 = vld [vmem:[#allocation9 + $0x18] sm:$0xff]
    %v369 = vld [vmem:[#allocation9 + $0x20] sm:$0xff]
    %v370 = vld [vmem:[#allocation9 + $0x28] sm:$0xff]
    %v371 = vld [vmem:[#allocation9 + $0x30] sm:$0xff]
    %v372 = vld [vmem:[#allocation9 + $0x38] sm:$0xff]
    %v373 = vld [vmem:[%s10] sm:$0x1]
    %v375 = vperm.slane %v373, 0
    %vm377 = vcmask 523264
    %v379 = vsel %vm377, %v364, 0
    %381 = vmatpush.msra.mxu0 0.0
    %382 = vmatpush.msra.mxu0 0.0
    %383 = vmatpush.msra.mxu0 0.0
    %384 = vmatpush.msra.mxu0 0.0
    %385 = vmatpush.msra.mxu0 0.0
    %386 = vmatpush.msra.mxu0 0.0
    %387 = vmatpush.msra.mxu0 0.0
    %388 = vmatpush.msra.mxu0 0.0
    %389 = vmatpush.msra.mxu0 %v372
    %390 = vmatpush.msra.mxu0 %v371
    %391 = vmatpush.msra.mxu0 %v370
    %392 = vmatpush.msra.mxu0 %v369
    %393 = vmatpush.msra.mxu0 %v368
    %394 = vmatpush.msra.mxu0 %v367
    %395 = vmatpush.msra.mxu0 %v366
    %396 = vmatpush.msra.mxu0 %v365
    %397 = vmatmul.f32.gmra.mxu0 %v379
    %v398 = vpop.f32.mrf.mxu0
    %v399 = vadd.f32 %v375, %v398
    %400 = vdwg.mxu0
    %v401 = vld [vmem:[#allocation10] sm:$0x1]
    %v403 = vperm.slane %v401, 0
    %v405 = vmul.f32 %v399, %v403
    %v406 = vld [vmem:[#allocation12] sm:$0x1]
    %v408 = vperm.slane %v406, 0
    %v410 = vadd.f32 %v405, %v408
    %v411 = vld [vmem:[%s15] sm:$0xff]
    %v412 = vld [vmem:[%s15 + $0x8] sm:$0x7]
    %v413 = vld [vmem:[#allocation15] sm:$0xff]
    %v414 = vld [vmem:[#allocation15 + $0x8] sm:$0xff]
    %v415 = vld [vmem:[#allocation15 + $0x10] sm:$0xff]
    %v416 = vld [vmem:[#allocation15 + $0x18] sm:$0xff]
    %v417 = vld [vmem:[#allocation15 + $0x20] sm:$0xff]
    %v418 = vld [vmem:[#allocation15 + $0x28] sm:$0xff]
    %v419 = vld [vmem:[#allocation15 + $0x30] sm:$0xf]
    %v421 = vsel %vm330, %v410, 0
    %v424 = vsel %vm334, %v419, 0
    %426 = vmatpush.msra.mxu0 0.0
    %427 = vmatpush.msra.mxu0 0.0
    %428 = vmatpush.msra.mxu0 0.0
    %429 = vmatpush.msra.mxu0 0.0
    %430 = vmatpush.msra.mxu0 0.0
    %431 = vmatpush.msra.mxu0 0.0
    %432 = vmatpush.msra.mxu0 0.0
    %433 = vmatpush.msra.mxu0 0.0
    %434 = vmatpush.msra.mxu0 0.0
    %435 = vmatpush.msra.mxu0 %v424
    %436 = vmatpush.msra.mxu0 %v418
    %437 = vmatpush.msra.mxu0 %v417
    %438 = vmatpush.msra.mxu0 %v416
    %439 = vmatpush.msra.mxu0 %v415
    %440 = vmatpush.msra.mxu0 %v414
    %441 = vmatpush.msra.mxu0 %v413
    %442 = vmatmul.f32.gmra.mxu0 %v421
    %v443 = vpop.f32.mrf.mxu0
    %v444 = vadd.f32 0.0, %v443
    %445 = vdwg.mxu0
    %v447 = vsel %vm273, %v412, 0
    %449 = vmatpush.msra.mxu0 0.0
    %450 = vmatpush.msra.mxu0 0.0
    %451 = vmatpush.msra.mxu0 0.0
    %452 = vmatpush.msra.mxu0 0.0
    %453 = vmatpush.msra.mxu0 0.0
    %454 = vmatpush.msra.mxu0 0.0
    %455 = vmatpush.msra.mxu0 0.0
    %456 = vmatpush.msra.mxu0 0.0
    %457 = vmatpush.msra.mxu0 0.0
    %458 = vmatpush.msra.mxu0 0.0
    %459 = vmatpush.msra.mxu0 0.0
    %460 = vmatpush.msra.mxu0 0.0
    %461 = vmatpush.msra.mxu0 0.0
    %462 = vmatpush.msra.mxu0 0.0
    %463 = vmatpush.msra.mxu0 %v447
    %464 = vmatpush.msra.mxu0 %v411
    %465 = vmatmul.f32.gmra.mxu0 %v271
    %v466 = vpop.f32.mrf.mxu0
    %v467 = vadd.f32 %v444, %v466
    %468 = vdwg.mxu0
    %v469 = vld [vmem:[%s17] sm:$0x1]
    %v471 = vperm.slane %v469, 0
    %v473 = vadd.f32 %v467, %v471
    %v474 = vld [vmem:[#allocation2] sm:$0xff]
    %v475 = vld [vmem:[%s14] sm:$0xff]
    %v476 = vld [vmem:[%s14 + $0x8] sm:$0xff]
    %vm477 = vcmask 130048
    %v479 = vsel %vm477, %v474, 0
    %481 = vmatpush.msra.mxu0 0.0
    %482 = vmatpush.msra.mxu0 0.0
    %483 = vmatpush.msra.mxu0 0.0
    %484 = vmatpush.msra.mxu0 0.0
    %485 = vmatpush.msra.mxu0 0.0
    %486 = vmatpush.msra.mxu0 0.0
    %487 = vmatpush.msra.mxu0 0.0
    %488 = vmatpush.msra.mxu0 0.0
    %489 = vmatpush.msra.mxu0 0.0
    %490 = vmatpush.msra.mxu0 0.0
    %491 = vmatpush.msra.mxu0 0.0
    %492 = vmatpush.msra.mxu0 0.0
    %493 = vmatpush.msra.mxu0 0.0
    %494 = vmatpush.msra.mxu0 0.0
    %495 = vmatpush.msra.mxu0 %v476
    %496 = vmatpush.msra.mxu0 %v475
    %497 = vmatmul.f32.gmra.mxu0 %v479
    %v498 = vpop.f32.mrf.mxu0
    %v499 = vadd.f32 0.0, %v498
    %500 = vdwg.mxu0
    %v501 = vld [vmem:[#allocation13] sm:$0xff]
    %v502 = vld [vmem:[#allocation13 + $0x8] sm:$0xff]
    %v503 = vld [vmem:[#allocation13 + $0x10] sm:$0xff]
    %v504 = vld [vmem:[#allocation13 + $0x18] sm:$0xff]
    %v505 = vld [vmem:[%s18] sm:$0xff]
    %v506 = vld [vmem:[%s18 + $0x8] sm:$0xff]
    %v507 = vld [vmem:[%s18 + $0x10] sm:$0xff]
    %v508 = vld [vmem:[%s18 + $0x18] sm:$0xff]
    %v509 = vld [vmem:[%s18 + $0x20] sm:$0xff]
    %v510 = vld [vmem:[%s18 + $0x28] sm:$0xff]
    %v511 = vld [vmem:[%s18 + $0x30] sm:$0xff]
    %v512 = vld [vmem:[%s18 + $0x38] sm:$0xff]
    %v513 = vld [vmem:[%s18 + $0x40] sm:$0xff]
    %v514 = vld [vmem:[%s18 + $0x48] sm:$0xff]
    %v515 = vld [vmem:[%s18 + $0x50] sm:$0xff]
    %v516 = vld [vmem:[%s18 + $0x58] sm:$0xff]
    %v517 = vld [vmem:[%s18 + $0x60] sm:$0xff]
    %v518 = vld [vmem:[%s18 + $0x68] sm:$0xff]
    %v519 = vld [vmem:[%s18 + $0x70] sm:$0xff]
    %v520 = vld [vmem:[%s18 + $0x78] sm:$0xff]
    %v521 = vld [vmem:[%s19] sm:$0x1]
    %v522 = vld [vmem:[%s3] sm:$0x3]
    %vm523 = vcmask 261120
    %v525 = vsel %vm523, %v522, 0
    %527 = vmatpush.msra.mxu0 0.0
    %528 = vmatpush.msra.mxu0 0.0
    %529 = vmatpush.msra.mxu0 0.0
    %530 = vmatpush.msra.mxu0 0.0
    %531 = vmatpush.msra.mxu0 0.0
    %532 = vmatpush.msra.mxu0 0.0
    %533 = vmatpush.msra.mxu0 0.0
    %534 = vmatpush.msra.mxu0 0.0
    %535 = vmatpush.msra.mxu0 0.0
    %536 = vmatpush.msra.mxu0 0.0
    %537 = vmatpush.msra.mxu0 0.0
    %538 = vmatpush.msra.mxu0 0.0
    %539 = vmatpush.msra.mxu0 %v504
    %540 = vmatpush.msra.mxu0 %v503
    %541 = vmatpush.msra.mxu0 %v502
    %542 = vmatpush.msra.mxu0 %v501
    %543 = vmatmul.f32.gmra.mxu0 %v525
    %v544 = vpop.f32.mrf.mxu0
    %v545 = vadd.f32 %v473, %v544
    %546 = vdwg.mxu0
    %v547 = vperm.slane %v499, 7
    %v548 = vadd.f32 %v545, %v547
    %v549 = vmax.f32 %v548, 0.0
    %v551 = vperm.slane %v521, 0
    %553 = vmatpush.msra.mxu0 %v520
    %554 = vmatpush.msra.mxu0 %v519
    %555 = vmatpush.msra.mxu0 %v518
    %556 = vmatpush.msra.mxu0 %v517
    %557 = vmatpush.msra.mxu0 %v516
    %558 = vmatpush.msra.mxu0 %v515
    %559 = vmatpush.msra.mxu0 %v514
    %560 = vmatpush.msra.mxu0 %v513
    %561 = vmatpush.msra.mxu0 %v512
    %562 = vmatpush.msra.mxu0 %v511
    %563 = vmatpush.msra.mxu0 %v510
    %564 = vmatpush.msra.mxu0 %v509
    %565 = vmatpush.msra.mxu0 %v508
    %566 = vmatpush.msra.mxu0 %v507
    %567 = vmatpush.msra.mxu0 %v506
    %568 = vmatpush.msra.mxu0 %v505
    %569 = vmatmul.f32.gmra.mxu0 %v549
    %v570 = vpop.f32.mrf.mxu0
    %v571 = vadd.f32 %v551, %v570
    %572 = vdwg.mxu0
    %v573 = vmul.f32 %v571, 0.27890465
    %v574 = vsub.f32 %v522, %v573
    %v575 = vmul.f32 %v574, 1.0413208
    %v576 = vmul.f32 %v575, 0.97006845
    %v577 = vmul.f32 %v571, 0.2428315
    %v578 = vadd.f32 %v576, %v577
    %v580 = vsel %vm523, %v578, 0
    %582 = vmatpush.msra.mxu0 0.0
    %583 = vmatpush.msra.mxu0 0.0
    %584 = vmatpush.msra.mxu0 0.0
    %585 = vmatpush.msra.mxu0 0.0
    %586 = vmatpush.msra.mxu0 0.0
    %587 = vmatpush.msra.mxu0 0.0
    %588 = vmatpush.msra.mxu0 0.0
    %589 = vmatpush.msra.mxu0 0.0
    %590 = vmatpush.msra.mxu0 0.0
    %591 = vmatpush.msra.mxu0 0.0
    %592 = vmatpush.msra.mxu0 0.0
    %593 = vmatpush.msra.mxu0 0.0
    %594 = vmatpush.msra.mxu0 %v504
    %595 = vmatpush.msra.mxu0 %v503
    %596 = vmatpush.msra.mxu0 %v502
    %597 = vmatpush.msra.mxu0 %v501
    %598 = vmatmul.f32.gmra.mxu0 %v580
    %v599 = vpop.f32.mrf.mxu0
    %v600 = vadd.f32 %v473, %v599
    %601 = vdwg.mxu0
    %v602 = vperm.slane %v499, 6
    %v603 = vadd.f32 %v600, %v602
    %v604 = vmax.f32 %v603, 0.0
    %605 = vmatpush.msra.mxu0 %v520
    %606 = vmatpush.msra.mxu0 %v519
    %607 = vmatpush.msra.mxu0 %v518
    %608 = vmatpush.msra.mxu0 %v517
    %609 = vmatpush.msra.mxu0 %v516
    %610 = vmatpush.msra.mxu0 %v515
    %611 = vmatpush.msra.mxu0 %v514
    %612 = vmatpush.msra.mxu0 %v513
    %613 = vmatpush.msra.mxu0 %v512
    %614 = vmatpush.msra.mxu0 %v511
    %615 = vmatpush.msra.mxu0 %v510
    %616 = vmatpush.msra.mxu0 %v509
    %617 = vmatpush.msra.mxu0 %v508
    %618 = vmatpush.msra.mxu0 %v507
    %619 = vmatpush.msra.mxu0 %v506
    %620 = vmatpush.msra.mxu0 %v505
    %621 = vmatmul.f32.gmra.mxu0 %v604
    %v622 = vpop.f32.mrf.mxu0
    %v623 = vadd.f32 %v551, %v622
    %624 = vdwg.mxu0
    %v625 = vmul.f32 %v623, 0.2428315
    %v626 = vsub.f32 %v578, %v625
    %v627 = vmul.f32 %v626, 1.0308551
    %v628 = vmul.f32 %v627, 0.97849894
    %v629 = vmul.f32 %v623, 0.20625193
    %v630 = vadd.f32 %v628, %v629
    %v632 = vsel %vm523, %v630, 0
    %634 = vmatpush.msra.mxu0 0.0
    %635 = vmatpush.msra.mxu0 0.0
    %636 = vmatpush.msra.mxu0 0.0
    %637 = vmatpush.msra.mxu0 0.0
    %638 = vmatpush.msra.mxu0 0.0
    %639 = vmatpush.msra.mxu0 0.0
    %640 = vmatpush.msra.mxu0 0.0
    %641 = vmatpush.msra.mxu0 0.0
    %642 = vmatpush.msra.mxu0 0.0
    %643 = vmatpush.msra.mxu0 0.0
    %644 = vmatpush.msra.mxu0 0.0
    %645 = vmatpush.msra.mxu0 0.0
    %646 = vmatpush.msra.mxu0 %v504
    %647 = vmatpush.msra.mxu0 %v503
    %648 = vmatpush.msra.mxu0 %v502
    %649 = vmatpush.msra.mxu0 %v501
    %650 = vmatmul.f32.gmra.mxu0 %v632
    %v651 = vpop.f32.mrf.mxu0
    %v652 = vadd.f32 %v473, %v651
    %653 = vdwg.mxu0
    %v654 = vperm.slane %v499, 5
    %v655 = vadd.f32 %v652, %v654
    %v656 = vmax.f32 %v655, 0.0
    %657 = vmatpush.msra.mxu0 %v520
    %658 = vmatpush.msra.mxu0 %v519
    %659 = vmatpush.msra.mxu0 %v518
    %660 = vmatpush.msra.mxu0 %v517
    %661 = vmatpush.msra.mxu0 %v516
    %662 = vmatpush.msra.mxu0 %v515
    %663 = vmatpush.msra.mxu0 %v514
    %664 = vmatpush.msra.mxu0 %v513
    %665 = vmatpush.msra.mxu0 %v512
    %666 = vmatpush.msra.mxu0 %v511
    %667 = vmatpush.msra.mxu0 %v510
    %668 = vmatpush.msra.mxu0 %v509
    %669 = vmatpush.msra.mxu0 %v508
    %670 = vmatpush.msra.mxu0 %v507
    %671 = vmatpush.msra.mxu0 %v506
    %672 = vmatpush.msra.mxu0 %v505
    %673 = vmatmul.f32.gmra.mxu0 %v656
    %v674 = vpop.f32.mrf.mxu0
    %v675 = vadd.f32 %v551, %v674
    %676 = vdwg.mxu0
    %v677 = vmul.f32 %v675, 0.20625193
    %v678 = vsub.f32 %v630, %v677
    %v679 = vmul.f32 %v678, 1.0219735
    %v680 = vmul.f32 %v679, 0.9855783
    %v681 = vmul.f32 %v675, 0.16922018
    %v682 = vadd.f32 %v680, %v681
    %v684 = vsel %vm523, %v682, 0
    %686 = vmatpush.msra.mxu0 0.0
    %687 = vmatpush.msra.mxu0 0.0
    %688 = vmatpush.msra.mxu0 0.0
    %689 = vmatpush.msra.mxu0 0.0
    %690 = vmatpush.msra.mxu0 0.0
    %691 = vmatpush.msra.mxu0 0.0
    %692 = vmatpush.msra.mxu0 0.0
    %693 = vmatpush.msra.mxu0 0.0
    %694 = vmatpush.msra.mxu0 0.0
    %695 = vmatpush.msra.mxu0 0.0
    %696 = vmatpush.msra.mxu0 0.0
    %697 = vmatpush.msra.mxu0 0.0
    %698 = vmatpush.msra.mxu0 %v504
    %699 = vmatpush.msra.mxu0 %v503
    %700 = vmatpush.msra.mxu0 %v502
    %701 = vmatpush.msra.mxu0 %v501
    %702 = vmatmul.f32.gmra.mxu0 %v684
    %v703 = vpop.f32.mrf.mxu0
    %v704 = vadd.f32 %v473, %v703
    %705 = vdwg.mxu0
    %v706 = vperm.slane %v499, 4
    %v707 = vadd.f32 %v704, %v706
    %v708 = vmax.f32 %v707, 0.0
    %709 = vmatpush.msra.mxu0 %v520
    %710 = vmatpush.msra.mxu0 %v519
    %711 = vmatpush.msra.mxu0 %v518
    %712 = vmatpush.msra.mxu0 %v517
    %713 = vmatpush.msra.mxu0 %v516
    %714 = vmatpush.msra.mxu0 %v515
    %715 = vmatpush.msra.mxu0 %v514
    %716 = vmatpush.msra.mxu0 %v513
    %717 = vmatpush.msra.mxu0 %v512
    %718 = vmatpush.msra.mxu0 %v511
    %719 = vmatpush.msra.mxu0 %v510
    %720 = vmatpush.msra.mxu0 %v509
    %721 = vmatpush.msra.mxu0 %v508
    %722 = vmatpush.msra.mxu0 %v507
    %723 = vmatpush.msra.mxu0 %v506
    %724 = vmatpush.msra.mxu0 %v505
    %725 = vmatmul.f32.gmra.mxu0 %v708
    %v726 = vpop.f32.mrf.mxu0
    %v727 = vadd.f32 %v551, %v726
    %728 = vdwg.mxu0
    %v729 = vmul.f32 %v727, 0.16922018
    %v730 = vsub.f32 %v682, %v729
    %v731 = vmul.f32 %v730, 1.0146327
    %v732 = vmul.f32 %v731, 0.9912804
    %v733 = vmul.f32 %v727, 0.13176958
    %v734 = vadd.f32 %v732, %v733
    %v736 = vsel %vm523, %v734, 0
    %738 = vmatpush.msra.mxu0 0.0
    %739 = vmatpush.msra.mxu0 0.0
    %740 = vmatpush.msra.mxu0 0.0
    %741 = vmatpush.msra.mxu0 0.0
    %742 = vmatpush.msra.mxu0 0.0
    %743 = vmatpush.msra.mxu0 0.0
    %744 = vmatpush.msra.mxu0 0.0
    %745 = vmatpush.msra.mxu0 0.0
    %746 = vmatpush.msra.mxu0 0.0
    %747 = vmatpush.msra.mxu0 0.0
    %748 = vmatpush.msra.mxu0 0.0
    %749 = vmatpush.msra.mxu0 0.0
    %750 = vmatpush.msra.mxu0 %v504
    %751 = vmatpush.msra.mxu0 %v503
    %752 = vmatpush.msra.mxu0 %v502
    %753 = vmatpush.msra.mxu0 %v501
    %754 = vmatmul.f32.gmra.mxu0 %v736
    %v755 = vpop.f32.mrf.mxu0
    %v756 = vadd.f32 %v473, %v755
    %757 = vdwg.mxu0
    %v758 = vperm.slane %v499, 3
    %v759 = vadd.f32 %v756, %v758
    %v760 = vmax.f32 %v759, 0.0
    %761 = vmatpush.msra.mxu0 %v520
    %762 = vmatpush.msra.mxu0 %v519
    %763 = vmatpush.msra.mxu0 %v518
    %764 = vmatpush.msra.mxu0 %v517
    %765 = vmatpush.msra.mxu0 %v516
    %766 = vmatpush.msra.mxu0 %v515
    %767 = vmatpush.msra.mxu0 %v514
    %768 = vmatpush.msra.mxu0 %v513
    %769 = vmatpush.msra.mxu0 %v512
    %770 = vmatpush.msra.mxu0 %v511
    %771 = vmatpush.msra.mxu0 %v510
    %772 = vmatpush.msra.mxu0 %v509
    %773 = vmatpush.msra.mxu0 %v508
    %774 = vmatpush.msra.mxu0 %v507
    %775 = vmatpush.msra.mxu0 %v506
    %776 = vmatpush.msra.mxu0 %v505
    %777 = vmatmul.f32.gmra.mxu0 %v760
    %v778 = vpop.f32.mrf.mxu0
    %v779 = vadd.f32 %v551, %v778
    %780 = vdwg.mxu0
    %v781 = vmul.f32 %v779, 0.13176958
    %v782 = vsub.f32 %v734, %v781
    %v783 = vmul.f32 %v782, 1.0087963
    %v784 = vmul.f32 %v783, 0.9955849
    %v785 = vmul.f32 %v779, 0.093865186
    %v786 = vadd.f32 %v784, %v785
    %v788 = vsel %vm523, %v786, 0
    %790 = vmatpush.msra.mxu0 0.0
    %791 = vmatpush.msra.mxu0 0.0
    %792 = vmatpush.msra.mxu0 0.0
    %793 = vmatpush.msra.mxu0 0.0
    %794 = vmatpush.msra.mxu0 0.0
    %795 = vmatpush.msra.mxu0 0.0
    %796 = vmatpush.msra.mxu0 0.0
    %797 = vmatpush.msra.mxu0 0.0
    %798 = vmatpush.msra.mxu0 0.0
    %799 = vmatpush.msra.mxu0 0.0
    %800 = vmatpush.msra.mxu0 0.0
    %801 = vmatpush.msra.mxu0 0.0
    %802 = vmatpush.msra.mxu0 %v504
    %803 = vmatpush.msra.mxu0 %v503
    %804 = vmatpush.msra.mxu0 %v502
    %805 = vmatpush.msra.mxu0 %v501
    %806 = vmatmul.f32.gmra.mxu0 %v788
    %v807 = vpop.f32.mrf.mxu0
    %v808 = vadd.f32 %v473, %v807
    %809 = vdwg.mxu0
    %v810 = vperm.slane %v499, 2
    %v811 = vadd.f32 %v808, %v810
    %v812 = vmax.f32 %v811, 0.0
    %813 = vmatpush.msra.mxu0 %v520
    %814 = vmatpush.msra.mxu0 %v519
    %815 = vmatpush.msra.mxu0 %v518
    %816 = vmatpush.msra.mxu0 %v517
    %817 = vmatpush.msra.mxu0 %v516
    %818 = vmatpush.msra.mxu0 %v515
    %819 = vmatpush.msra.mxu0 %v514
    %820 = vmatpush.msra.mxu0 %v513
    %821 = vmatpush.msra.mxu0 %v512
    %822 = vmatpush.msra.mxu0 %v511
    %823 = vmatpush.msra.mxu0 %v510
    %824 = vmatpush.msra.mxu0 %v509
    %825 = vmatpush.msra.mxu0 %v508
    %826 = vmatpush.msra.mxu0 %v507
    %827 = vmatpush.msra.mxu0 %v506
    %828 = vmatpush.msra.mxu0 %v505
    %829 = vmatmul.f32.gmra.mxu0 %v812
    %v830 = vpop.f32.mrf.mxu0
    %v831 = vadd.f32 %v551, %v830
    %832 = vdwg.mxu0
    %v833 = vmul.f32 %v831, 0.093865186
    %v834 = vsub.f32 %v786, %v833
    %v835 = vmul.f32 %v834, 1.0044347
    %v836 = vmul.f32 %v835, 0.9984776
    %v837 = vmul.f32 %v831, 0.05515943
    %v838 = vadd.f32 %v836, %v837
    %v840 = vsel %vm523, %v838, 0
    %842 = vmatpush.msra.mxu0 0.0
    %843 = vmatpush.msra.mxu0 0.0
    %844 = vmatpush.msra.mxu0 0.0
    %845 = vmatpush.msra.mxu0 0.0
    %846 = vmatpush.msra.mxu0 0.0
    %847 = vmatpush.msra.mxu0 0.0
    %848 = vmatpush.msra.mxu0 0.0
    %849 = vmatpush.msra.mxu0 0.0
    %850 = vmatpush.msra.mxu0 0.0
    %851 = vmatpush.msra.mxu0 0.0
    %852 = vmatpush.msra.mxu0 0.0
    %853 = vmatpush.msra.mxu0 0.0
    %854 = vmatpush.msra.mxu0 %v504
    %855 = vmatpush.msra.mxu0 %v503
    %856 = vmatpush.msra.mxu0 %v502
    %857 = vmatpush.msra.mxu0 %v501
    %858 = vmatmul.f32.gmra.mxu0 %v840
    %v859 = vpop.f32.mrf.mxu0
    %v860 = vadd.f32 %v473, %v859
    %861 = vdwg.mxu0
    %v862 = vperm.slane %v499, 1
    %v863 = vadd.f32 %v860, %v862
    %v864 = vmax.f32 %v863, 0.0
    %865 = vmatpush.msra.mxu0 %v520
    %866 = vmatpush.msra.mxu0 %v519
    %867 = vmatpush.msra.mxu0 %v518
    %868 = vmatpush.msra.mxu0 %v517
    %869 = vmatpush.msra.mxu0 %v516
    %870 = vmatpush.msra.mxu0 %v515
    %871 = vmatpush.msra.mxu0 %v514
    %872 = vmatpush.msra.mxu0 %v513
    %873 = vmatpush.msra.mxu0 %v512
    %874 = vmatpush.msra.mxu0 %v511
    %875 = vmatpush.msra.mxu0 %v510
    %876 = vmatpush.msra.mxu0 %v509
    %877 = vmatpush.msra.mxu0 %v508
    %878 = vmatpush.msra.mxu0 %v507
    %879 = vmatpush.msra.mxu0 %v506
    %880 = vmatpush.msra.mxu0 %v505
    %881 = vmatmul.f32.gmra.mxu0 %v864
    %v882 = vpop.f32.mrf.mxu0
    %v883 = vadd.f32 %v551, %v882
    %884 = vdwg.mxu0
    %v885 = vmul.f32 %v883, 0.05515943
    %v886 = vsub.f32 %v838, %v885
    %v887 = vmul.f32 %v886, 1.0015248
    %v888 = vmul.f32 %v887, 0.99995
    %v889 = vmul.f32 %v883, 0.01
    %v890 = vadd.f32 %v888, %v889
    %v892 = vsel %vm523, %v890, 0
    %894 = vmatpush.msra.mxu0 0.0
    %895 = vmatpush.msra.mxu0 0.0
    %896 = vmatpush.msra.mxu0 0.0
    %897 = vmatpush.msra.mxu0 0.0
    %898 = vmatpush.msra.mxu0 0.0
    %899 = vmatpush.msra.mxu0 0.0
    %900 = vmatpush.msra.mxu0 0.0
    %901 = vmatpush.msra.mxu0 0.0
    %902 = vmatpush.msra.mxu0 0.0
    %903 = vmatpush.msra.mxu0 0.0
    %904 = vmatpush.msra.mxu0 0.0
    %905 = vmatpush.msra.mxu0 0.0
    %906 = vmatpush.msra.mxu0 %v504
    %907 = vmatpush.msra.mxu0 %v503
    %908 = vmatpush.msra.mxu0 %v502
    %909 = vmatpush.msra.mxu0 %v501
    %910 = vmatmul.f32.gmra.mxu0 %v892
    %v911 = vpop.f32.mrf.mxu0
    %v912 = vadd.f32 %v473, %v911
    %913 = vdwg.mxu0
    %v914 = vperm.slane %v499, 0
    %v915 = vadd.f32 %v912, %v914
    %v916 = vmax.f32 %v915, 0.0
    %917 = vmatpush.msra.mxu0 %v520
    %918 = vmatpush.msra.mxu0 %v519
    %919 = vmatpush.msra.mxu0 %v518
    %920 = vmatpush.msra.mxu0 %v517
    %921 = vmatpush.msra.mxu0 %v516
    %922 = vmatpush.msra.mxu0 %v515
    %923 = vmatpush.msra.mxu0 %v514
    %924 = vmatpush.msra.mxu0 %v513
    %925 = vmatpush.msra.mxu0 %v512
    %926 = vmatpush.msra.mxu0 %v511
    %927 = vmatpush.msra.mxu0 %v510
    %928 = vmatpush.msra.mxu0 %v509
    %929 = vmatpush.msra.mxu0 %v508
    %930 = vmatpush.msra.mxu0 %v507
    %931 = vmatpush.msra.mxu0 %v506
    %932 = vmatpush.msra.mxu0 %v505
    %933 = vmatmul.f32.gmra.mxu0 %v916
    %v934 = vpop.f32.mrf.mxu0
    %v935 = vadd.f32 %v551, %v934
    %936 = vdwg.mxu0
    %v937 = vmul.f32 %v935, 0.01
    %v938 = vsub.f32 %v890, %v937
    %v939 = vmul.f32 %v938, 1.00005
    %v940 = vmul.f32 %v935, 0.0
    %v941 = vadd.f32 %v939, %v940
    %v942 = vld [vmem:[#allocation16] sm:$0xff]
    %v943 = vld [vmem:[#allocation16 + $0x8] sm:$0xff]
    %v944 = vld [vmem:[#allocation16 + $0x10] sm:$0xff]
    %v945 = vld [vmem:[#allocation16 + $0x18] sm:$0xff]
    %v946 = vld [vmem:[%s21] sm:$0x1]
    %v948 = vperm.slane %v946, 0
    %v951 = vsel %vm523, %v941, 0
    %953 = vmatpush.msra.mxu0 0.0
    %954 = vmatpush.msra.mxu0 0.0
    %955 = vmatpush.msra.mxu0 0.0
    %956 = vmatpush.msra.mxu0 0.0
    %957 = vmatpush.msra.mxu0 0.0
    %958 = vmatpush.msra.mxu0 0.0
    %959 = vmatpush.msra.mxu0 0.0
    %960 = vmatpush.msra.mxu0 0.0
    %961 = vmatpush.msra.mxu0 0.0
    %962 = vmatpush.msra.mxu0 0.0
    %963 = vmatpush.msra.mxu0 0.0
    %964 = vmatpush.msra.mxu0 0.0
    %965 = vmatpush.msra.mxu0 %v945
    %966 = vmatpush.msra.mxu0 %v944
    %967 = vmatpush.msra.mxu0 %v943
    %968 = vmatpush.msra.mxu0 %v942
    %969 = vmatmul.f32.gmra.mxu0 %v951
    %v970 = vpop.f32.mrf.mxu0
    %v971 = vadd.f32 %v948, %v970
    %972 = vdwg.mxu0
    %v973 = vmax.f32 %v971, 0.0
    %v974 = vld [vmem:[#allocation18] sm:$0xff]
    %v975 = vld [vmem:[#allocation18 + $0x8] sm:$0xff]
    %v976 = vld [vmem:[#allocation18 + $0x10] sm:$0xff]
    %v977 = vld [vmem:[#allocation18 + $0x18] sm:$0xff]
    %v978 = vld [vmem:[#allocation18 + $0x20] sm:$0xff]
    %v979 = vld [vmem:[#allocation18 + $0x28] sm:$0xff]
    %v980 = vld [vmem:[#allocation18 + $0x30] sm:$0xff]
    %v981 = vld [vmem:[#allocation18 + $0x38] sm:$0xff]
    %v982 = vld [vmem:[#allocation18 + $0x40] sm:$0xff]
    %v983 = vld [vmem:[#allocation18 + $0x48] sm:$0xff]
    %v984 = vld [vmem:[#allocation18 + $0x50] sm:$0xff]
    %v985 = vld [vmem:[#allocation18 + $0x58] sm:$0xff]
    %v986 = vld [vmem:[#allocation18 + $0x60] sm:$0xff]
    %v987 = vld [vmem:[#allocation18 + $0x68] sm:$0xff]
    %v988 = vld [vmem:[#allocation18 + $0x70] sm:$0xff]
    %v989 = vld [vmem:[#allocation18 + $0x78] sm:$0xff]
    %v990 = vld [vmem:[#allocation18 + $0x80] sm:$0xff]
    %v991 = vld [vmem:[#allocation18 + $0x88] sm:$0xff]
    %v992 = vld [vmem:[#allocation18 + $0x90] sm:$0xff]
    %v993 = vld [vmem:[#allocation18 + $0x98] sm:$0xff]
    %v994 = vld [vmem:[#allocation18 + $0xa0] sm:$0xff]
    %v995 = vld [vmem:[#allocation18 + $0xa8] sm:$0xff]
    %v996 = vld [vmem:[#allocation18 + $0xb0] sm:$0xff]
    %v997 = vld [vmem:[#allocation18 + $0xb8] sm:$0xff]
    %v998 = vld [vmem:[#allocation18 + $0xc0] sm:$0xff]
    %v999 = vld [vmem:[#allocation18 + $0xc8] sm:$0xff]
    %v1000 = vld [vmem:[#allocation18 + $0xd0] sm:$0xff]
    %v1001 = vld [vmem:[#allocation18 + $0xd8] sm:$0xff]
    %v1002 = vld [vmem:[#allocation18 + $0xe0] sm:$0xff]
    %v1003 = vld [vmem:[#allocation18 + $0xe8] sm:$0xff]
    %v1004 = vld [vmem:[#allocation18 + $0xf0] sm:$0xff]
    %v1005 = vld [vmem:[#allocation18 + $0xf8] sm:$0xff]
    %v1006 = vld [vmem:[#allocation18 + $0x100] sm:$0xff]
    %v1007 = vld [vmem:[#allocation18 + $0x108] sm:$0xff]
    %v1008 = vld [vmem:[#allocation18 + $0x110] sm:$0xff]
    %v1009 = vld [vmem:[#allocation18 + $0x118] sm:$0xff]
    %v1010 = vld [vmem:[#allocation18 + $0x120] sm:$0xff]
    %v1011 = vld [vmem:[#allocation18 + $0x128] sm:$0xff]
    %v1012 = vld [vmem:[#allocation18 + $0x130] sm:$0xff]
    %v1013 = vld [vmem:[#allocation18 + $0x138] sm:$0xff]
    %v1014 = vld [vmem:[#allocation18 + $0x140] sm:$0xff]
    %v1015 = vld [vmem:[#allocation18 + $0x148] sm:$0xff]
    %v1016 = vld [vmem:[#allocation18 + $0x150] sm:$0xff]
    %v1017 = vld [vmem:[#allocation18 + $0x158] sm:$0xff]
    %v1018 = vld [vmem:[#allocation18 + $0x160] sm:$0xff]
    %v1019 = vld [vmem:[#allocation18 + $0x168] sm:$0xff]
    %v1020 = vld [vmem:[#allocation18 + $0x170] sm:$0xff]
    %v1021 = vld [vmem:[#allocation18 + $0x178] sm:$0xff]
    %v1022 = vld [vmem:[#allocation18 + $0x180] sm:$0xff]
    %v1023 = vld [vmem:[#allocation18 + $0x188] sm:$0xff]
    %v1024 = vld [vmem:[#allocation18 + $0x190] sm:$0xff]
    %v1025 = vld [vmem:[#allocation18 + $0x198] sm:$0xff]
    %v1026 = vld [vmem:[#allocation18 + $0x1a0] sm:$0xff]
    %v1027 = vld [vmem:[#allocation18 + $0x1a8] sm:$0xff]
    %v1028 = vld [vmem:[#allocation18 + $0x1b0] sm:$0xff]
    %v1029 = vld [vmem:[#allocation18 + $0x1b8] sm:$0xff]
    %v1030 = vld [vmem:[#allocation18 + $0x1c0] sm:$0xff]
    %v1031 = vld [vmem:[#allocation18 + $0x1c8] sm:$0xff]
    %v1032 = vld [vmem:[#allocation18 + $0x1d0] sm:$0xff]
    %v1033 = vld [vmem:[#allocation18 + $0x1d8] sm:$0xff]
    %v1034 = vld [vmem:[#allocation18 + $0x1e0] sm:$0xff]
    %v1035 = vld [vmem:[#allocation18 + $0x1e8] sm:$0xff]
    %v1036 = vld [vmem:[#allocation18 + $0x1f0] sm:$0xff]
    %v1037 = vld [vmem:[#allocation18 + $0x1f8] sm:$0xff]
    %v1038 = vld [vmem:[#allocation18 + $0x200] sm:$0xff]
    %v1039 = vld [vmem:[#allocation18 + $0x208] sm:$0xff]
    %v1040 = vld [vmem:[#allocation18 + $0x210] sm:$0xff]
    %v1041 = vld [vmem:[#allocation18 + $0x218] sm:$0xff]
    %v1042 = vld [vmem:[#allocation18 + $0x220] sm:$0xff]
    %v1043 = vld [vmem:[#allocation18 + $0x228] sm:$0xff]
    %v1044 = vld [vmem:[#allocation18 + $0x230] sm:$0xff]
    %v1045 = vld [vmem:[#allocation18 + $0x238] sm:$0xff]
    %v1046 = vld [vmem:[#allocation18 + $0x240] sm:$0xff]
    %v1047 = vld [vmem:[#allocation18 + $0x248] sm:$0xff]
    %v1048 = vld [vmem:[#allocation18 + $0x250] sm:$0xff]
    %v1049 = vld [vmem:[#allocation18 + $0x258] sm:$0xff]
    %v1050 = vld [vmem:[#allocation18 + $0x260] sm:$0xff]
    %v1051 = vld [vmem:[#allocation18 + $0x268] sm:$0xff]
    %v1052 = vld [vmem:[#allocation18 + $0x270] sm:$0xff]
    %v1053 = vld [vmem:[#allocation18 + $0x278] sm:$0xff]
    %v1054 = vld [vmem:[%s23] sm:$0x1f]
    %v1056 = vperm.slane %v1054, 0
    %v1057 = vperm.slane %v1054, 1
    %v1058 = vperm.slane %v1054, 2
    %v1059 = vperm.slane %v1054, 3
    %v1060 = vperm.slane %v1054, 4
    %1066 = vmatpush.msra.mxu0 %v1049
    %1067 = vmatpush.msra.mxu0 %v1044
    %1068 = vmatpush.msra.mxu0 %v1039
    %1069 = vmatpush.msra.mxu0 %v1034
    %1070 = vmatpush.msra.mxu0 %v1029
    %1071 = vmatpush.msra.mxu0 %v1024
    %1072 = vmatpush.msra.mxu0 %v1019
    %1073 = vmatpush.msra.mxu0 %v1014
    %1074 = vmatpush.msra.mxu0 %v1009
    %1075 = vmatpush.msra.mxu0 %v1004
    %1076 = vmatpush.msra.mxu0 %v999
    %1077 = vmatpush.msra.mxu0 %v994
    %1078 = vmatpush.msra.mxu0 %v989
    %1079 = vmatpush.msra.mxu0 %v984
    %1080 = vmatpush.msra.mxu0 %v979
    %1081 = vmatpush.msra.mxu0 %v974
    %1082 = vmatmul.f32.gmra.mxu0 %v973
    %v1083 = vpop.f32.mrf.mxu0
    %v1084 = vadd.f32 %v1056, %v1083
    %1085 = vdwg.mxu0
    %1086 = vmatpush.msra.mxu0 %v1050
    %1087 = vmatpush.msra.mxu0 %v1045
    %1088 = vmatpush.msra.mxu0 %v1040
    %1089 = vmatpush.msra.mxu0 %v1035
    %1090 = vmatpush.msra.mxu0 %v1030
    %1091 = vmatpush.msra.mxu0 %v1025
    %1092 = vmatpush.msra.mxu0 %v1020
    %1093 = vmatpush.msra.mxu0 %v1015
    %1094 = vmatpush.msra.mxu0 %v1010
    %1095 = vmatpush.msra.mxu0 %v1005
    %1096 = vmatpush.msra.mxu0 %v1000
    %1097 = vmatpush.msra.mxu0 %v995
    %1098 = vmatpush.msra.mxu0 %v990
    %1099 = vmatpush.msra.mxu0 %v985
    %1100 = vmatpush.msra.mxu0 %v980
    %1101 = vmatpush.msra.mxu0 %v975
    %1102 = vmatmul.f32.gmra.mxu0 %v973
    %v1103 = vpop.f32.mrf.mxu0
    %v1104 = vadd.f32 %v1057, %v1103
    %1105 = vdwg.mxu0
    %1106 = vmatpush.msra.mxu0 %v1051
    %1107 = vmatpush.msra.mxu0 %v1046
    %1108 = vmatpush.msra.mxu0 %v1041
    %1109 = vmatpush.msra.mxu0 %v1036
    %1110 = vmatpush.msra.mxu0 %v1031
    %1111 = vmatpush.msra.mxu0 %v1026
    %1112 = vmatpush.msra.mxu0 %v1021
    %1113 = vmatpush.msra.mxu0 %v1016
    %1114 = vmatpush.msra.mxu0 %v1011
    %1115 = vmatpush.msra.mxu0 %v1006
    %1116 = vmatpush.msra.mxu0 %v1001
    %1117 = vmatpush.msra.mxu0 %v996
    %1118 = vmatpush.msra.mxu0 %v991
    %1119 = vmatpush.msra.mxu0 %v986
    %1120 = vmatpush.msra.mxu0 %v981
    %1121 = vmatpush.msra.mxu0 %v976
    %1122 = vmatmul.f32.gmra.mxu0 %v973
    %v1123 = vpop.f32.mrf.mxu0
    %v1124 = vadd.f32 %v1058, %v1123
    %1125 = vdwg.mxu0
    %1126 = vmatpush.msra.mxu0 %v1052
    %1127 = vmatpush.msra.mxu0 %v1047
    %1128 = vmatpush.msra.mxu0 %v1042
    %1129 = vmatpush.msra.mxu0 %v1037
    %1130 = vmatpush.msra.mxu0 %v1032
    %1131 = vmatpush.msra.mxu0 %v1027
    %1132 = vmatpush.msra.mxu0 %v1022
    %1133 = vmatpush.msra.mxu0 %v1017
    %1134 = vmatpush.msra.mxu0 %v1012
    %1135 = vmatpush.msra.mxu0 %v1007
    %1136 = vmatpush.msra.mxu0 %v1002
    %1137 = vmatpush.msra.mxu0 %v997
    %1138 = vmatpush.msra.mxu0 %v992
    %1139 = vmatpush.msra.mxu0 %v987
    %1140 = vmatpush.msra.mxu0 %v982
    %1141 = vmatpush.msra.mxu0 %v977
    %1142 = vmatmul.f32.gmra.mxu0 %v973
    %v1143 = vpop.f32.mrf.mxu0
    %v1144 = vadd.f32 %v1059, %v1143
    %1145 = vdwg.mxu0
    %1146 = vmatpush.msra.mxu0 %v1053
    %1147 = vmatpush.msra.mxu0 %v1048
    %1148 = vmatpush.msra.mxu0 %v1043
    %1149 = vmatpush.msra.mxu0 %v1038
    %1150 = vmatpush.msra.mxu0 %v1033
    %1151 = vmatpush.msra.mxu0 %v1028
    %1152 = vmatpush.msra.mxu0 %v1023
    %1153 = vmatpush.msra.mxu0 %v1018
    %1154 = vmatpush.msra.mxu0 %v1013
    %1155 = vmatpush.msra.mxu0 %v1008
    %1156 = vmatpush.msra.mxu0 %v1003
    %1157 = vmatpush.msra.mxu0 %v998
    %1158 = vmatpush.msra.mxu0 %v993
    %1159 = vmatpush.msra.mxu0 %v988
    %1160 = vmatpush.msra.mxu0 %v983
    %1161 = vmatpush.msra.mxu0 %v978
    %1162 = vmatmul.f32.gmra.mxu0 %v973
    %v1163 = vpop.f32.mrf.mxu0
    %v1164 = vadd.f32 %v1060, %v1163
    %1165 = vdwg.mxu0
    %v1166 = vld [vmem:[#allocation19] sm:$0x1f]
    %v1168 = vperm.slane %v1166, 0
    %v1169 = vperm.slane %v1166, 1
    %v1170 = vperm.slane %v1166, 2
    %v1171 = vperm.slane %v1166, 3
    %v1172 = vperm.slane %v1166, 4
    %v1178 = vmul.f32 %v1084, %v1168
    %v1179 = vmul.f32 %v1104, %v1169
    %v1180 = vmul.f32 %v1124, %v1170
    %v1181 = vmul.f32 %v1144, %v1171
    %v1182 = vmul.f32 %v1164, %v1172
    %v1183 = vld [vmem:[%s25] sm:$0x1f]
    %v1185 = vperm.slane %v1183, 0
    %v1186 = vperm.slane %v1183, 1
    %v1187 = vperm.slane %v1183, 2
    %v1188 = vperm.slane %v1183, 3
    %v1189 = vperm.slane %v1183, 4
    %v1195 = vadd.f32 %v1178, %v1185
    %v1196 = vadd.f32 %v1179, %v1186
    %v1197 = vadd.f32 %v1180, %v1187
    %v1198 = vadd.f32 %v1181, %v1188
    %v1199 = vadd.f32 %v1182, %v1189
    %v1204 = vrot.slane %v1196, 6
    %v1205 = vrot.slane %v1197, 4
    %v1206 = vrot.slane %v1198, 2
    %vm1207 = vcmask 1041408
    %v1208 = vsel %vm1207, %v1195, %v1204
    %vm1209 = vcmask 1045508
    %v1210 = vsel %vm1209, %v1205, %v1206
    %v1211 = vsel %vm334, %v1208, %v1210
    %1213 = vst [vmem:[%s26] sm:$0xff] %v1211
    %vm1214 = vcmask 9216
    %1215 = vst.msk [vmem:[%s26 + $0x8] sm:$0x3] %vm1214, %v1199
    // Predicated region
    $region154: #{diff_ab_parsec_forward.1} parent=1 // pred_check
      _
    $region155: #{diff_ab_parsec_forward.1} parent=1 // pred_check_branch
      %1217 = sbr.rel (0) target = $region157
    $region156: #{diff_ab_parsec_forward.1} parent=1 // pred_region
      _
    $region157: #{diff_ab_parsec_forward.1} parent=1 // pred_fallthru
      _
    // Predicated region
    $region158: #{diff_ab_parsec_forward.1} parent=1 // pred_check
      _
    $region159: #{diff_ab_parsec_forward.1} parent=1 // pred_check_branch
      %1219 = sbr.rel (0) target = $region161
    $region160: #{diff_ab_parsec_forward.1} parent=1 // pred_region
      _
    $region161: #{diff_ab_parsec_forward.1} parent=1 // pred_fallthru
      _
    %1220 = vsyncpa [#allocation3], 1
    %1221 = vsyncpa [#allocation5], 1
    %1222 = vsyncpa [#allocation8], 1
    %1223 = vsyncpa [#allocation11], 1
    %1224 = vsyncpa [#allocation14], 1
    %1225 = vsyncpa [#allocation17], 1
    %1226 = vsyncpa [#allocation20], 1

</llo_original>
